<compile_context>
chip_gen: v7x
topology: tpu7x:2x2x1
jax: 0.10.0
libtpu: 0.0.40
codegen_flags: <defaults>
</compile_context>

<pallas_src>
import math
import functools

import jax
import jax.numpy as jnp
from jax.experimental import pallas as pl
from jax.experimental.pallas import tpu as pltpu

LN_EPS = 1e-5  # PyTorch nn.LayerNorm default


def _layer_norm(h, gamma, beta):
    mu = jnp.mean(h, axis=-1, keepdims=True)
    var = jnp.mean((h - mu) ** 2, axis=-1, keepdims=True)
    return (h - mu) * jax.lax.rsqrt(var + LN_EPS) * gamma + beta


def encoder_stack_kernel(num_heads,
                         x_ref, maskb_ref,
                         wqkv_ref, bqkv_ref, wo3_ref, bo_ref,
                         g1_ref, be1_ref, g2_ref, be2_ref,
                         wf1_ref, bf1_ref, wf2_ref, bf2_ref,
                         o_ref):
    layer = pl.program_id(1)

    # Layer 0: seed the resident carry.  o_ref keeps the activation in VMEM
    # across the whole (arbitrary) layer axis; it is written back to HBM only
    # when the batch-tile block index changes.
    @pl.when(layer == 0)
    def _():
        o_ref[...] = x_ref[...]

    x = o_ref[...].astype(jnp.float32)          # (R, D) = (bt*S, D) f32 carry
    R, D = x.shape
    bt, _, S = maskb_ref.shape                  # batch tile / seq len (static)
    H = num_heads
    dh = D // H

    xb = x.astype(jnp.bfloat16)

    # Fused QKV projection: one MXU op with M = bt*S rows, N = 3D.  The
    # 1/sqrt(dh) scale is folded into the Q slice of Wqkv / bqkv (wrapper).
    qkv = jnp.dot(xb, wqkv_ref[...],
                  preferred_element_type=jnp.float32) + bqkv_ref[...]   # (R, 3D)
    qkv3 = qkv.reshape(bt, S, 3 * D)            # per-sequence view for attention

    # Additive key-padding mask (bt, 1, S); precomputed in the wrapper.
    add_mask = maskb_ref[...]

    # Per-head attention.  Static lane slices feed the batched dot_generals
    # directly (no stack), and Wo is folded per head (wo3 = Wo reshaped to
    # (H, dh, D)) so there is no H-way concat — contributions are accumulated.
    attn = None
    for h in range(H):
        qh = qkv3[:, :, 0 * D + h * dh:0 * D + (h + 1) * dh].astype(jnp.bfloat16)
        kh = qkv3[:, :, 1 * D + h * dh:1 * D + (h + 1) * dh].astype(jnp.bfloat16)
        vh = qkv3[:, :, 2 * D + h * dh:2 * D + (h + 1) * dh].astype(jnp.bfloat16)

        s = jax.lax.dot_general(qh, kh, (((2,), (2,)), ((0,), (0,))),
                                preferred_element_type=jnp.float32)      # (bt,S,S)
        s = s + add_mask
        s = s - jnp.max(s, axis=-1, keepdims=True)
        p = jnp.exp(s)
        # EUP approx reciprocal instead of a VALU divide.
        p = p * pl.reciprocal(jnp.sum(p, axis=-1, keepdims=True), approx=True)

        oh = jax.lax.dot_general(p.astype(jnp.bfloat16), vh,
                                 (((2,), (1,)), ((0,), (0,))),
                                 preferred_element_type=jnp.float32)     # (bt,S,dh)

        contrib = jnp.dot(oh.reshape(R, dh).astype(jnp.bfloat16), wo3_ref[h],
                          preferred_element_type=jnp.float32)            # (R, D)
        attn = contrib if attn is None else attn + contrib
    attn = attn + bo_ref[...]

    # dropout1 is identity (eval); residual + LayerNorm 1 (f32 VPU path).
    h1 = _layer_norm(attn + x, g1_ref[...], be1_ref[...])

    # FeedForward: Linear -> ReLU -> Linear, bf16 matmuls with f32 accumulation.
    f = jnp.dot(h1.astype(jnp.bfloat16), wf1_ref[...],
                preferred_element_type=jnp.float32) + bf1_ref[...]
    f = jnp.maximum(f, 0.0)
    f = jnp.dot(f.astype(jnp.bfloat16), wf2_ref[...],
                preferred_element_type=jnp.float32) + bf2_ref[...]

    # dropout2 is identity (eval); residual + LayerNorm 2, write the carry.
    o_ref[...] = _layer_norm(f + h1, g2_ref[...], be2_ref[...]).astype(o_ref.dtype)


def _choose_batch_tile(B, S):
    """Largest batch tile that still leaves >=2 'parallel' tiles (so v7x's two
    TensorCores both get work) while keeping the row block a sublane multiple;
    fall back to folding the whole batch."""
    if B > 1:
        for bt in range(B // 2, 0, -1):
            if B % bt == 0 and (bt * S) % 8 == 0:
                return bt
    return B


def _vmem_limit_bytes(bt, S, D, F, H):
    """Explicit VMEM budget from actual block sizes, clamped to the current
    generation's per-TensorCore capacity (64 MiB on v7x, 128 MiB on v5e/v6e)."""
    dh = D // H
    wgt = 2 * 2 * (3 * D * D + D * D + 2 * D * F)        # bf16 weights, 2x buffered
    bias = 2 * 4 * (3 * D + D + F + D + 4 * D)           # f32 biases/LN, 2x buffered
    act = 4 * (2 * 2 * bt * S * D                        # x input + out carry
               + 2 * bt * S                              # additive mask bias
               + bt * S * 3 * D                          # fused qkv
               + 2 * bt * S * S                          # one head's logits / probs
               + bt * S * dh                             # one head's output
               + 2 * bt * S * D                          # attn accum + h1
               + bt * S * F)                             # ffn hidden
    needed = wgt + bias + act + (4 << 20)
    try:
        cap = int(pltpu.get_tpu_info().vmem_capacity_bytes)
    except Exception:
        cap = 64 << 20                                   # conservative fallback
    return int(min(max(needed, 32 << 20), (cap * 3) // 4))


def encoder_stack(x, mask, stacked, num_heads, n_layers):
    """Full encoder stack. x: (B,S,D) f32, mask: (B,S) f32 (1=keep, 0=pad)."""
    B, S, D = x.shape
    F = stacked["wf1"].shape[-1]
    H = num_heads
    assert D % H == 0
    dh = D // H

    bt = _choose_batch_tile(B, S)
    nb = B // bt

    # Activations as a lane-dense row slab (bt*S rows per block).
    x2 = x.reshape(B * S, D)
    # Layer-invariant additive key-padding mask, hoisted out of the kernel body.
    mask_bias = jnp.where(mask == 0.0, -1e9, 0.0).astype(jnp.float32)[:, None, :]

    def wspec(shape):
        # layer-stacked parameter: block = one layer's slice, indexed by l.
        nd = len(shape)
        return pl.BlockSpec((None,) + shape,
                            lambda b, l, _nd=nd: (l,) + (0,) * _nd)

    in_specs = [
        pl.BlockSpec((bt * S, D), lambda b, l: (b, 0)),        # x rows (resident)
        pl.BlockSpec((bt, 1, S), lambda b, l: (b, 0, 0)),      # additive mask bias
        wspec((D, 3 * D)), wspec((1, 3 * D)),                  # Wqkv (bf16), bqkv
        wspec((H, dh, D)), wspec((1, D)),                      # Wo per-head (bf16), bo
        wspec((1, D)),     wspec((1, D)),                      # LN1 gamma, beta
        wspec((1, D)),     wspec((1, D)),                      # LN2 gamma, beta
        wspec((D, F)),     wspec((1, F)),                      # FFN W1 (bf16), b1
        wspec((F, D)),     wspec((1, D)),                      # FFN W2 (bf16), b2
    ]
    out_spec = pl.BlockSpec((bt * S, D), lambda b, l: (b, 0))

    out2 = pl.pallas_call(
        functools.partial(encoder_stack_kernel, num_heads),
        out_shape=jax.ShapeDtypeStruct((B * S, D), x.dtype),
        grid=(nb, n_layers),
        in_specs=in_specs,
        out_specs=out_spec,
        compiler_params=pltpu.CompilerParams(
            dimension_semantics=("parallel", "arbitrary"),
            vmem_limit_bytes=_vmem_limit_bytes(bt, S, D, F, H)),
    )(x2, mask_bias,
      stacked["wqkv"], stacked["bqkv"], stacked["wo3"], stacked["bo"],
      stacked["g1"], stacked["be1"], stacked["g2"], stacked["be2"],
      stacked["wf1"], stacked["bf1"], stacked["wf2"], stacked["bf2"])
    return out2.reshape(B, S, D)


def stack_layer_params(layers, num_heads, w_dtype=jnp.bfloat16):
    """Stack per-layer params along a leading layer axis; fuse QKV; fold the
    1/sqrt(d_head) attention scale into the Q slice; reshape Wo to (H, dh, D)
    (per-head fold, removes the in-kernel concat); cast matmul weights to bf16
    (biases / LN params stay f32)."""
    D = layers[0]["wq"].shape[0]
    H = num_heads
    dh = D // H
    L = len(layers)
    scale = 1.0 / math.sqrt(dh)

    def stack(name):
        return jnp.stack([lp[name] for lp in layers], axis=0)

    wqkv = jnp.concatenate([stack("wq") * scale, stack("wk"), stack("wv")],
                           axis=-1).astype(w_dtype)                  # (L, D, 3D)
    bqkv = jnp.concatenate([stack("bq") * scale, stack("bk"), stack("bv")],
                           axis=-1)                                  # (L, 1, 3D)
    return {
        "wqkv": wqkv, "bqkv": bqkv,
        "wo3": stack("wo").reshape(L, H, dh, D).astype(w_dtype),     # (L, H, dh, D)
        "bo": stack("bo"),
        "g1": stack("g1"), "be1": stack("be1"),
        "g2": stack("g2"), "be2": stack("be2"),
        "wf1": stack("wf1").astype(w_dtype), "bf1": stack("bf1"),
        "wf2": stack("wf2").astype(w_dtype), "bf2": stack("bf2"),
    }


def sinusoidal_pe(max_len, d_model):
    pos = jnp.arange(max_len, dtype=jnp.float32)[:, None]
    i = jnp.arange(0, d_model, 2, dtype=jnp.float32)
    div = jnp.exp(-math.log(10000.0) * i / d_model)
    pe = jnp.zeros((max_len, d_model), dtype=jnp.float32)
    pe = pe.at[:, 0::2].set(jnp.sin(pos * div))
    pe = pe.at[:, 1::2].set(jnp.cos(pos * div))
    return pe


def init_params(key, vocab, d_model, n_layers, max_seq_len):
    d_ff = 4 * d_model
    keys = jax.random.split(key, 1 + n_layers)
    params = {
        "embed": jax.random.normal(keys[0], (vocab, d_model), jnp.float32) * 0.02,
        "pe": sinusoidal_pe(max_seq_len, d_model),
        "layers": [],
    }
    for li in range(n_layers):
        lk = jax.random.split(keys[1 + li], 6)
        std = 1.0 / math.sqrt(d_model)
        lp = {
            "wq": jax.random.normal(lk[0], (d_model, d_model), jnp.float32) * std,
            "wk": jax.random.normal(lk[1], (d_model, d_model), jnp.float32) * std,
            "wv": jax.random.normal(lk[2], (d_model, d_model), jnp.float32) * std,
            "wo": jax.random.normal(lk[3], (d_model, d_model), jnp.float32) * std,
            "bq": jnp.zeros((1, d_model), jnp.float32),
            "bk": jnp.zeros((1, d_model), jnp.float32),
            "bv": jnp.zeros((1, d_model), jnp.float32),
            "bo": jnp.zeros((1, d_model), jnp.float32),
            "g1": jnp.ones((1, d_model), jnp.float32),
            "be1": jnp.zeros((1, d_model), jnp.float32),
            "g2": jnp.ones((1, d_model), jnp.float32),
            "be2": jnp.zeros((1, d_model), jnp.float32),
            "wf1": jax.random.normal(lk[4], (d_model, d_ff), jnp.float32) * std,
            "bf1": jnp.zeros((1, d_ff), jnp.float32),
            "wf2": jax.random.normal(lk[5], (d_ff, d_model), jnp.float32)
                   * (1.0 / math.sqrt(d_ff)),
            "bf2": jnp.zeros((1, d_model), jnp.float32),
        }
        params["layers"].append(lp)
    return params


def transformer_encoder(token_ids, mask, params, num_heads):
    """token_ids: (B, S) int32, mask: (B, S) f32 -> (B, S, D) f32."""
    d_model = params["embed"].shape[1]
    # Embedding gather + scaling + positional encoding: plain-JAX glue.
    x = params["embed"][token_ids] * math.sqrt(d_model)
    x = x + params["pe"][: token_ids.shape[1]][None, :, :]
    stacked = stack_layer_params(params["layers"], num_heads)
    return encoder_stack(x, mask, stacked, num_heads, len(params["layers"]))


if __name__ == "__main__":
    # NOTE: for real benchmarking pick S, D (and d_head) as multiples of 128;
    # these toy dims exercise correctness, not performance.
    VOCAB, D_MODEL, NUM_HEADS, N_LAYERS = 16, 32, 4, 2
    B, S, MAX_LEN = 2, 8, 64

    key = jax.random.PRNGKey(0)
    k_param, k_tok = jax.random.split(key)

    params = init_params(k_param, VOCAB, D_MODEL, N_LAYERS, MAX_LEN)
    token_ids = jax.random.randint(k_tok, (B, S), 0, VOCAB, dtype=jnp.int32)
    mask = jnp.ones((B, S), jnp.float32)
    mask = mask.at[1, 6:].set(0.0)  # pad out the tail of the second sequence

    out = transformer_encoder(token_ids, mask, params, NUM_HEADS)
    out = jax.block_until_ready(out)
    assert out.shape == (B, S, D_MODEL) and bool(jnp.all(jnp.isfinite(out)))
    print("KERNEL_OK")
</pallas_src>

<mosaic_0001>
module attributes {stable_mosaic.version = 11 : i64} {
  func.func @encoder_stack_kernel(%arg0: i32, %arg1: i32, %arg2: memref<8x32xf32, #tpu.memory_space<vmem>>, %arg3: memref<1x1x8xf32, #tpu.memory_space<vmem>>, %arg4: memref<1x32x96xbf16, #tpu.memory_space<vmem>>, %arg5: memref<1x1x96xf32, #tpu.memory_space<vmem>>, %arg6: memref<1x4x8x32xbf16, #tpu.memory_space<vmem>>, %arg7: memref<1x1x32xf32, #tpu.memory_space<vmem>>, %arg8: memref<1x1x32xf32, #tpu.memory_space<vmem>>, %arg9: memref<1x1x32xf32, #tpu.memory_space<vmem>>, %arg10: memref<1x1x32xf32, #tpu.memory_space<vmem>>, %arg11: memref<1x1x32xf32, #tpu.memory_space<vmem>>, %arg12: memref<1x32x128xbf16, #tpu.memory_space<vmem>>, %arg13: memref<1x1x128xf32, #tpu.memory_space<vmem>>, %arg14: memref<1x128x32xbf16, #tpu.memory_space<vmem>>, %arg15: memref<1x1x32xf32, #tpu.memory_space<vmem>>, %arg16: memref<8x32xf32, #tpu.memory_space<vmem>>) attributes {dimension_semantics = [#tpu.dimension_semantics<parallel>, #tpu.dimension_semantics<arbitrary>], iteration_bounds = array<i64: 2, 2>, scalar_prefetch = 0 : i64, scratch_operands = 0 : i64, tpu.core_type = #tpu.core_type<tc>, window_params = [{transform_indices = @transform_0, window_bounds = array<i64: 8, 32>}, {transform_indices = @transform_1, window_bounds = array<i64: 1, 1, 8>}, {transform_indices = @transform_2, window_bounds = array<i64: 1, 32, 96>}, {transform_indices = @transform_3, window_bounds = array<i64: 1, 1, 96>}, {transform_indices = @transform_4, window_bounds = array<i64: 1, 4, 8, 32>}, {transform_indices = @transform_5, window_bounds = array<i64: 1, 1, 32>}, {transform_indices = @transform_6, window_bounds = array<i64: 1, 1, 32>}, {transform_indices = @transform_7, window_bounds = array<i64: 1, 1, 32>}, {transform_indices = @transform_8, window_bounds = array<i64: 1, 1, 32>}, {transform_indices = @transform_9, window_bounds = array<i64: 1, 1, 32>}, {transform_indices = @transform_10, window_bounds = array<i64: 1, 32, 128>}, {transform_indices = @transform_11, window_bounds = array<i64: 1, 1, 128>}, {transform_indices = @transform_12, window_bounds = array<i64: 1, 128, 32>}, {transform_indices = @transform_13, window_bounds = array<i64: 1, 1, 32>}, {transform_indices = @transform_14, window_bounds = array<i64: 8, 32>}]} {
    %c0_i32 = arith.constant 0 : i32
    %0 = arith.cmpi eq, %arg1, %c0_i32 : i32
    %1 = arith.extui %0 : i1 to i32
    %c0_i32_0 = arith.constant 0 : i32
    %2 = arith.cmpi ne, %1, %c0_i32_0 : i32
    scf.if %2 {
      %c0_86 = arith.constant 0 : index
      %c0_87 = arith.constant 0 : index
      %198 = vector.load %arg2[%c0_86, %c0_87] : memref<8x32xf32, #tpu.memory_space<vmem>>, vector<8x32xf32>
      %c0_88 = arith.constant 0 : index
      %c0_89 = arith.constant 0 : index
      %199 = vector.load %arg16[%c0_88, %c0_89] : memref<8x32xf32, #tpu.memory_space<vmem>>, vector<8x32xf32>
      tpu.vector_store %arg16[%c0_88, %c0_89], %198 {strides = array<i32>} : memref<8x32xf32, #tpu.memory_space<vmem>>, vector<8x32xf32>,
    } else {
    }
    %c0 = arith.constant 0 : index
    %c0_1 = arith.constant 0 : index
    %3 = vector.load %arg16[%c0, %c0_1] : memref<8x32xf32, #tpu.memory_space<vmem>>, vector<8x32xf32>
    %4 = arith.truncf %3 : vector<8x32xf32> to vector<8x32xbf16>
    %c0_2 = arith.constant 0 : index
    %c0_3 = arith.constant 0 : index
    %c0_4 = arith.constant 0 : index
    %5 = vector.load %arg4[%c0_2, %c0_3, %c0_4] : memref<1x32x96xbf16, #tpu.memory_space<vmem>>, vector<1x32x96xbf16>
    %6 = vector.shape_cast %5 : vector<1x32x96xbf16> to vector<32x96xbf16>
    %cst = arith.constant dense<0.000000e+00> : vector<8x96xf32>
    %7 = tpu.matmul %4, %6, %cst {dimension_numbers = #tpu.dot_dimension_numbers<[1], [0], [0], [1], [0, 0, 1, 1], [], []>} : vector<8x32xbf16>, vector<32x96xbf16>, vector<8x96xf32> -> vector<8x96xf32>
    %c0_5 = arith.constant 0 : index
    %c0_6 = arith.constant 0 : index
    %c0_7 = arith.constant 0 : index
    %8 = vector.load %arg5[%c0_5, %c0_6, %c0_7] : memref<1x1x96xf32, #tpu.memory_space<vmem>>, vector<1x1x96xf32>
    %9 = vector.shape_cast %8 : vector<1x1x96xf32> to vector<1x96xf32>
    %10 = vector.broadcast %9 : vector<1x96xf32> to vector<8x96xf32>
    %11 = arith.addf %7, %10 : vector<8x96xf32>
    %12 = vector.shape_cast %11 : vector<8x96xf32> to vector<1x8x96xf32>
    %c0_8 = arith.constant 0 : index
    %c0_9 = arith.constant 0 : index
    %c0_10 = arith.constant 0 : index
    %13 = vector.load %arg3[%c0_8, %c0_9, %c0_10] : memref<1x1x8xf32, #tpu.memory_space<vmem>>, vector<1x1x8xf32>
    %14 = vector.extract_strided_slice %12 {offsets = [0, 0, 0], sizes = [1, 8, 8], strides = [1, 1, 1]} : vector<1x8x96xf32> to vector<1x8x8xf32>
    %15 = arith.truncf %14 : vector<1x8x8xf32> to vector<1x8x8xbf16>
    %16 = vector.extract_strided_slice %12 {offsets = [0, 0, 32], sizes = [1, 8, 8], strides = [1, 1, 1]} : vector<1x8x96xf32> to vector<1x8x8xf32>
    %17 = arith.truncf %16 : vector<1x8x8xf32> to vector<1x8x8xbf16>
    %18 = vector.extract_strided_slice %12 {offsets = [0, 0, 64], sizes = [1, 8, 8], strides = [1, 1, 1]} : vector<1x8x96xf32> to vector<1x8x8xf32>
    %19 = arith.truncf %18 : vector<1x8x8xf32> to vector<1x8x8xbf16>
    %cst_11 = arith.constant dense<0.000000e+00> : vector<1x8x8xf32>
    %20 = tpu.matmul %15, %17, %cst_11 {dimension_numbers = #tpu.dot_dimension_numbers<[2], [2], [1], [1], [0, 0, 0, 1, 1, 1], [0], [0]>} : vector<1x8x8xbf16>, vector<1x8x8xbf16>, vector<1x8x8xf32> -> vector<1x8x8xf32>
    %21 = vector.broadcast %13 : vector<1x1x8xf32> to vector<1x8x8xf32>
    %22 = arith.addf %20, %21 : vector<1x8x8xf32>
    %cst_12 = arith.constant dense<0xFF800000> : vector<1x8xf32>
    %23 = vector.multi_reduction <maximumf>, %22, %cst_12 [2] : vector<1x8x8xf32> to vector<1x8xf32>
    %24 = vector.shape_cast %23 : vector<1x8xf32> to vector<1x8x1xf32>
    %25 = vector.broadcast %24 : vector<1x8x1xf32> to vector<1x8x8xf32>
    %26 = arith.subf %22, %25 : vector<1x8x8xf32>
    %27 = math.exp %26 : vector<1x8x8xf32>
    %cst_13 = arith.constant dense<0.000000e+00> : vector<1x8xf32>
    %28 = vector.multi_reduction <add>, %27, %cst_13 [2] : vector<1x8x8xf32> to vector<1x8xf32>
    %29 = vector.shape_cast %28 : vector<1x8xf32> to vector<1x8x1xf32>
    %30 = tpu.reciprocal %29 {approx = true} : vector<1x8x1xf32> -> vector<1x8x1xf32>
    %31 = vector.broadcast %30 : vector<1x8x1xf32> to vector<1x8x8xf32>
    %32 = arith.mulf %27, %31 : vector<1x8x8xf32>
    %33 = arith.truncf %32 : vector<1x8x8xf32> to vector<1x8x8xbf16>
    %cst_14 = arith.constant dense<0.000000e+00> : vector<1x8x8xf32>
    %34 = tpu.matmul %33, %19, %cst_14 {dimension_numbers = #tpu.dot_dimension_numbers<[2], [1], [1], [2], [0, 0, 0, 1, 1, 2], [0], [0]>} : vector<1x8x8xbf16>, vector<1x8x8xbf16>, vector<1x8x8xf32> -> vector<1x8x8xf32>
    %35 = vector.shape_cast %34 : vector<1x8x8xf32> to vector<8x8xf32>
    %36 = arith.truncf %35 : vector<8x8xf32> to vector<8x8xbf16>
    %c0_15 = arith.constant 0 : index
    %c0_16 = arith.constant 0 : index
    %c0_17 = arith.constant 0 : index
    %c0_18 = arith.constant 0 : index
    %37 = vector.load %arg6[%c0_15, %c0_16, %c0_17, %c0_18] : memref<1x4x8x32xbf16, #tpu.memory_space<vmem>>, vector<1x1x8x32xbf16>
    %38 = vector.shape_cast %37 : vector<1x1x8x32xbf16> to vector<8x32xbf16>
    %cst_19 = arith.constant dense<0.000000e+00> : vector<8x32xf32>
    %39 = tpu.matmul %36, %38, %cst_19 {dimension_numbers = #tpu.dot_dimension_numbers<[1], [0], [0], [1], [0, 0, 1, 1], [], []>} : vector<8x8xbf16>, vector<8x32xbf16>, vector<8x32xf32> -> vector<8x32xf32>
    %40 = vector.extract_strided_slice %12 {offsets = [0, 0, 8], sizes = [1, 8, 8], strides = [1, 1, 1]} : vector<1x8x96xf32> to vector<1x8x8xf32>
    %41 = arith.truncf %40 : vector<1x8x8xf32> to vector<1x8x8xbf16>
    %42 = vector.extract_strided_slice %12 {offsets = [0, 0, 40], sizes = [1, 8, 8], strides = [1, 1, 1]} : vector<1x8x96xf32> to vector<1x8x8xf32>
    %43 = arith.truncf %42 : vector<1x8x8xf32> to vector<1x8x8xbf16>
    %44 = vector.extract_strided_slice %12 {offsets = [0, 0, 72], sizes = [1, 8, 8], strides = [1, 1, 1]} : vector<1x8x96xf32> to vector<1x8x8xf32>
    %45 = arith.truncf %44 : vector<1x8x8xf32> to vector<1x8x8xbf16>
    %cst_20 = arith.constant dense<0.000000e+00> : vector<1x8x8xf32>
    %46 = tpu.matmul %41, %43, %cst_20 {dimension_numbers = #tpu.dot_dimension_numbers<[2], [2], [1], [1], [0, 0, 0, 1, 1, 1], [0], [0]>} : vector<1x8x8xbf16>, vector<1x8x8xbf16>, vector<1x8x8xf32> -> vector<1x8x8xf32>
    %47 = vector.broadcast %13 : vector<1x1x8xf32> to vector<1x8x8xf32>
    %48 = arith.addf %46, %47 : vector<1x8x8xf32>
    %cst_21 = arith.constant dense<0xFF800000> : vector<1x8xf32>
    %49 = vector.multi_reduction <maximumf>, %48, %cst_21 [2] : vector<1x8x8xf32> to vector<1x8xf32>
    %50 = vector.shape_cast %49 : vector<1x8xf32> to vector<1x8x1xf32>
    %51 = vector.broadcast %50 : vector<1x8x1xf32> to vector<1x8x8xf32>
    %52 = arith.subf %48, %51 : vector<1x8x8xf32>
    %53 = math.exp %52 : vector<1x8x8xf32>
    %cst_22 = arith.constant dense<0.000000e+00> : vector<1x8xf32>
    %54 = vector.multi_reduction <add>, %53, %cst_22 [2] : vector<1x8x8xf32> to vector<1x8xf32>
    %55 = vector.shape_cast %54 : vector<1x8xf32> to vector<1x8x1xf32>
    %56 = tpu.reciprocal %55 {approx = true} : vector<1x8x1xf32> -> vector<1x8x1xf32>
    %57 = vector.broadcast %56 : vector<1x8x1xf32> to vector<1x8x8xf32>
    %58 = arith.mulf %53, %57 : vector<1x8x8xf32>
    %59 = arith.truncf %58 : vector<1x8x8xf32> to vector<1x8x8xbf16>
    %cst_23 = arith.constant dense<0.000000e+00> : vector<1x8x8xf32>
    %60 = tpu.matmul %59, %45, %cst_23 {dimension_numbers = #tpu.dot_dimension_numbers<[2], [1], [1], [2], [0, 0, 0, 1, 1, 2], [0], [0]>} : vector<1x8x8xbf16>, vector<1x8x8xbf16>, vector<1x8x8xf32> -> vector<1x8x8xf32>
    %61 = vector.shape_cast %60 : vector<1x8x8xf32> to vector<8x8xf32>
    %62 = arith.truncf %61 : vector<8x8xf32> to vector<8x8xbf16>
    %c0_24 = arith.constant 0 : index
    %c1 = arith.constant 1 : index
    %c0_25 = arith.constant 0 : index
    %c0_26 = arith.constant 0 : index
    %63 = vector.load %arg6[%c0_24, %c1, %c0_25, %c0_26] : memref<1x4x8x32xbf16, #tpu.memory_space<vmem>>, vector<1x1x8x32xbf16>
    %64 = vector.shape_cast %63 : vector<1x1x8x32xbf16> to vector<8x32xbf16>
    %cst_27 = arith.constant dense<0.000000e+00> : vector<8x32xf32>
    %65 = tpu.matmul %62, %64, %cst_27 {dimension_numbers = #tpu.dot_dimension_numbers<[1], [0], [0], [1], [0, 0, 1, 1], [], []>} : vector<8x8xbf16>, vector<8x32xbf16>, vector<8x32xf32> -> vector<8x32xf32>
    %66 = arith.addf %39, %65 : vector<8x32xf32>
    %67 = vector.extract_strided_slice %12 {offsets = [0, 0, 16], sizes = [1, 8, 8], strides = [1, 1, 1]} : vector<1x8x96xf32> to vector<1x8x8xf32>
    %68 = arith.truncf %67 : vector<1x8x8xf32> to vector<1x8x8xbf16>
    %69 = vector.extract_strided_slice %12 {offsets = [0, 0, 48], sizes = [1, 8, 8], strides = [1, 1, 1]} : vector<1x8x96xf32> to vector<1x8x8xf32>
    %70 = arith.truncf %69 : vector<1x8x8xf32> to vector<1x8x8xbf16>
    %71 = vector.extract_strided_slice %12 {offsets = [0, 0, 80], sizes = [1, 8, 8], strides = [1, 1, 1]} : vector<1x8x96xf32> to vector<1x8x8xf32>
    %72 = arith.truncf %71 : vector<1x8x8xf32> to vector<1x8x8xbf16>
    %cst_28 = arith.constant dense<0.000000e+00> : vector<1x8x8xf32>
    %73 = tpu.matmul %68, %70, %cst_28 {dimension_numbers = #tpu.dot_dimension_numbers<[2], [2], [1], [1], [0, 0, 0, 1, 1, 1], [0], [0]>} : vector<1x8x8xbf16>, vector<1x8x8xbf16>, vector<1x8x8xf32> -> vector<1x8x8xf32>
    %74 = vector.broadcast %13 : vector<1x1x8xf32> to vector<1x8x8xf32>
    %75 = arith.addf %73, %74 : vector<1x8x8xf32>
    %cst_29 = arith.constant dense<0xFF800000> : vector<1x8xf32>
    %76 = vector.multi_reduction <maximumf>, %75, %cst_29 [2] : vector<1x8x8xf32> to vector<1x8xf32>
    %77 = vector.shape_cast %76 : vector<1x8xf32> to vector<1x8x1xf32>
    %78 = vector.broadcast %77 : vector<1x8x1xf32> to vector<1x8x8xf32>
    %79 = arith.subf %75, %78 : vector<1x8x8xf32>
    %80 = math.exp %79 : vector<1x8x8xf32>
    %cst_30 = arith.constant dense<0.000000e+00> : vector<1x8xf32>
    %81 = vector.multi_reduction <add>, %80, %cst_30 [2] : vector<1x8x8xf32> to vector<1x8xf32>
    %82 = vector.shape_cast %81 : vector<1x8xf32> to vector<1x8x1xf32>
    %83 = tpu.reciprocal %82 {approx = true} : vector<1x8x1xf32> -> vector<1x8x1xf32>
    %84 = vector.broadcast %83 : vector<1x8x1xf32> to vector<1x8x8xf32>
    %85 = arith.mulf %80, %84 : vector<1x8x8xf32>
    %86 = arith.truncf %85 : vector<1x8x8xf32> to vector<1x8x8xbf16>
    %cst_31 = arith.constant dense<0.000000e+00> : vector<1x8x8xf32>
    %87 = tpu.matmul %86, %72, %cst_31 {dimension_numbers = #tpu.dot_dimension_numbers<[2], [1], [1], [2], [0, 0, 0, 1, 1, 2], [0], [0]>} : vector<1x8x8xbf16>, vector<1x8x8xbf16>, vector<1x8x8xf32> -> vector<1x8x8xf32>
    %88 = vector.shape_cast %87 : vector<1x8x8xf32> to vector<8x8xf32>
    %89 = arith.truncf %88 : vector<8x8xf32> to vector<8x8xbf16>
    %c0_32 = arith.constant 0 : index
    %c2 = arith.constant 2 : index
    %c0_33 = arith.constant 0 : index
    %c0_34 = arith.constant 0 : index
    %90 = vector.load %arg6[%c0_32, %c2, %c0_33, %c0_34] : memref<1x4x8x32xbf16, #tpu.memory_space<vmem>>, vector<1x1x8x32xbf16>
    %91 = vector.shape_cast %90 : vector<1x1x8x32xbf16> to vector<8x32xbf16>
    %cst_35 = arith.constant dense<0.000000e+00> : vector<8x32xf32>
    %92 = tpu.matmul %89, %91, %cst_35 {dimension_numbers = #tpu.dot_dimension_numbers<[1], [0], [0], [1], [0, 0, 1, 1], [], []>} : vector<8x8xbf16>, vector<8x32xbf16>, vector<8x32xf32> -> vector<8x32xf32>
    %93 = arith.addf %66, %92 : vector<8x32xf32>
    %94 = vector.extract_strided_slice %12 {offsets = [0, 0, 24], sizes = [1, 8, 8], strides = [1, 1, 1]} : vector<1x8x96xf32> to vector<1x8x8xf32>
    %95 = arith.truncf %94 : vector<1x8x8xf32> to vector<1x8x8xbf16>
    %96 = vector.extract_strided_slice %12 {offsets = [0, 0, 56], sizes = [1, 8, 8], strides = [1, 1, 1]} : vector<1x8x96xf32> to vector<1x8x8xf32>
    %97 = arith.truncf %96 : vector<1x8x8xf32> to vector<1x8x8xbf16>
    %98 = vector.extract_strided_slice %12 {offsets = [0, 0, 88], sizes = [1, 8, 8], strides = [1, 1, 1]} : vector<1x8x96xf32> to vector<1x8x8xf32>
    %99 = arith.truncf %98 : vector<1x8x8xf32> to vector<1x8x8xbf16>
    %cst_36 = arith.constant dense<0.000000e+00> : vector<1x8x8xf32>
    %100 = tpu.matmul %95, %97, %cst_36 {dimension_numbers = #tpu.dot_dimension_numbers<[2], [2], [1], [1], [0, 0, 0, 1, 1, 1], [0], [0]>} : vector<1x8x8xbf16>, vector<1x8x8xbf16>, vector<1x8x8xf32> -> vector<1x8x8xf32>
    %101 = vector.broadcast %13 : vector<1x1x8xf32> to vector<1x8x8xf32>
    %102 = arith.addf %100, %101 : vector<1x8x8xf32>
    %cst_37 = arith.constant dense<0xFF800000> : vector<1x8xf32>
    %103 = vector.multi_reduction <maximumf>, %102, %cst_37 [2] : vector<1x8x8xf32> to vector<1x8xf32>
    %104 = vector.shape_cast %103 : vector<1x8xf32> to vector<1x8x1xf32>
    %105 = vector.broadcast %104 : vector<1x8x1xf32> to vector<1x8x8xf32>
    %106 = arith.subf %102, %105 : vector<1x8x8xf32>
    %107 = math.exp %106 : vector<1x8x8xf32>
    %cst_38 = arith.constant dense<0.000000e+00> : vector<1x8xf32>
    %108 = vector.multi_reduction <add>, %107, %cst_38 [2] : vector<1x8x8xf32> to vector<1x8xf32>
    %109 = vector.shape_cast %108 : vector<1x8xf32> to vector<1x8x1xf32>
    %110 = tpu.reciprocal %109 {approx = true} : vector<1x8x1xf32> -> vector<1x8x1xf32>
    %111 = vector.broadcast %110 : vector<1x8x1xf32> to vector<1x8x8xf32>
    %112 = arith.mulf %107, %111 : vector<1x8x8xf32>
    %113 = arith.truncf %112 : vector<1x8x8xf32> to vector<1x8x8xbf16>
    %cst_39 = arith.constant dense<0.000000e+00> : vector<1x8x8xf32>
    %114 = tpu.matmul %113, %99, %cst_39 {dimension_numbers = #tpu.dot_dimension_numbers<[2], [1], [1], [2], [0, 0, 0, 1, 1, 2], [0], [0]>} : vector<1x8x8xbf16>, vector<1x8x8xbf16>, vector<1x8x8xf32> -> vector<1x8x8xf32>
    %115 = vector.shape_cast %114 : vector<1x8x8xf32> to vector<8x8xf32>
    %116 = arith.truncf %115 : vector<8x8xf32> to vector<8x8xbf16>
    %c0_40 = arith.constant 0 : index
    %c3 = arith.constant 3 : index
    %c0_41 = arith.constant 0 : index
    %c0_42 = arith.constant 0 : index
    %117 = vector.load %arg6[%c0_40, %c3, %c0_41, %c0_42] : memref<1x4x8x32xbf16, #tpu.memory_space<vmem>>, vector<1x1x8x32xbf16>
    %118 = vector.shape_cast %117 : vector<1x1x8x32xbf16> to vector<8x32xbf16>
    %cst_43 = arith.constant dense<0.000000e+00> : vector<8x32xf32>
    %119 = tpu.matmul %116, %118, %cst_43 {dimension_numbers = #tpu.dot_dimension_numbers<[1], [0], [0], [1], [0, 0, 1, 1], [], []>} : vector<8x8xbf16>, vector<8x32xbf16>, vector<8x32xf32> -> vector<8x32xf32>
    %120 = arith.addf %93, %119 : vector<8x32xf32>
    %c0_44 = arith.constant 0 : index
    %c0_45 = arith.constant 0 : index
    %c0_46 = arith.constant 0 : index
    %121 = vector.load %arg7[%c0_44, %c0_45, %c0_46] : memref<1x1x32xf32, #tpu.memory_space<vmem>>, vector<1x1x32xf32>
    %122 = vector.shape_cast %121 : vector<1x1x32xf32> to vector<1x32xf32>
    %123 = vector.broadcast %122 : vector<1x32xf32> to vector<8x32xf32>
    %124 = arith.addf %120, %123 : vector<8x32xf32>
    %125 = arith.addf %124, %3 : vector<8x32xf32>
    %c0_47 = arith.constant 0 : index
    %c0_48 = arith.constant 0 : index
    %c0_49 = arith.constant 0 : index
    %126 = vector.load %arg8[%c0_47, %c0_48, %c0_49] : memref<1x1x32xf32, #tpu.memory_space<vmem>>, vector<1x1x32xf32>
    %127 = vector.shape_cast %126 : vector<1x1x32xf32> to vector<1x32xf32>
    %c0_50 = arith.constant 0 : index
    %c0_51 = arith.constant 0 : index
    %c0_52 = arith.constant 0 : index
    %128 = vector.load %arg9[%c0_50, %c0_51, %c0_52] : memref<1x1x32xf32, #tpu.memory_space<vmem>>, vector<1x1x32xf32>
    %129 = vector.shape_cast %128 : vector<1x1x32xf32> to vector<1x32xf32>
    %cst_53 = arith.constant dense<0.000000e+00> : vector<8xf32>
    %130 = vector.multi_reduction <add>, %125, %cst_53 [1] : vector<8x32xf32> to vector<8xf32>
    %131 = vector.shape_cast %130 : vector<8xf32> to vector<8x1xf32>
    %cst_54 = arith.constant 3.200000e+01 : f32
    %132 = vector.broadcast %cst_54 : f32 to vector<8x1xf32>
    %133 = arith.divf %131, %132 : vector<8x1xf32>
    %134 = vector.broadcast %133 : vector<8x1xf32> to vector<8x32xf32>
    %135 = arith.subf %125, %134 : vector<8x32xf32>
    %136 = arith.mulf %135, %135 : vector<8x32xf32>
    %cst_55 = arith.constant dense<0.000000e+00> : vector<8xf32>
    %137 = vector.multi_reduction <add>, %136, %cst_55 [1] : vector<8x32xf32> to vector<8xf32>
    %138 = vector.shape_cast %137 : vector<8xf32> to vector<8x1xf32>
    %cst_56 = arith.constant 3.200000e+01 : f32
    %139 = vector.broadcast %cst_56 : f32 to vector<8x1xf32>
    %140 = arith.divf %138, %139 : vector<8x1xf32>
    %141 = vector.broadcast %133 : vector<8x1xf32> to vector<8x32xf32>
    %142 = arith.subf %125, %141 : vector<8x32xf32>
    %cst_57 = arith.constant 9.99999974E-6 : f32
    %143 = vector.broadcast %cst_57 : f32 to vector<8x1xf32>
    %144 = arith.addf %140, %143 : vector<8x1xf32>
    %145 = math.rsqrt %144 : vector<8x1xf32>
    %146 = vector.broadcast %145 : vector<8x1xf32> to vector<8x32xf32>
    %147 = arith.mulf %142, %146 : vector<8x32xf32>
    %148 = vector.broadcast %127 : vector<1x32xf32> to vector<8x32xf32>
    %149 = arith.mulf %147, %148 : vector<8x32xf32>
    %150 = vector.broadcast %129 : vector<1x32xf32> to vector<8x32xf32>
    %151 = arith.addf %149, %150 : vector<8x32xf32>
    %152 = arith.truncf %151 : vector<8x32xf32> to vector<8x32xbf16>
    %c0_58 = arith.constant 0 : index
    %c0_59 = arith.constant 0 : index
    %c0_60 = arith.constant 0 : index
    %153 = vector.load %arg12[%c0_58, %c0_59, %c0_60] : memref<1x32x128xbf16, #tpu.memory_space<vmem>>, vector<1x32x128xbf16>
    %154 = vector.shape_cast %153 : vector<1x32x128xbf16> to vector<32x128xbf16>
    %cst_61 = arith.constant dense<0.000000e+00> : vector<8x128xf32>
    %155 = tpu.matmul %152, %154, %cst_61 {dimension_numbers = #tpu.dot_dimension_numbers<[1], [0], [0], [1], [0, 0, 1, 1], [], []>} : vector<8x32xbf16>, vector<32x128xbf16>, vector<8x128xf32> -> vector<8x128xf32>
    %c0_62 = arith.constant 0 : index
    %c0_63 = arith.constant 0 : index
    %c0_64 = arith.constant 0 : index
    %156 = vector.load %arg13[%c0_62, %c0_63, %c0_64] : memref<1x1x128xf32, #tpu.memory_space<vmem>>, vector<1x1x128xf32>
    %157 = vector.shape_cast %156 : vector<1x1x128xf32> to vector<1x128xf32>
    %158 = vector.broadcast %157 : vector<1x128xf32> to vector<8x128xf32>
    %159 = arith.addf %155, %158 : vector<8x128xf32>
    %cst_65 = arith.constant 0.000000e+00 : f32
    %160 = vector.broadcast %cst_65 : f32 to vector<8x128xf32>
    %161 = arith.maximumf %159, %160 : vector<8x128xf32>
    %162 = arith.truncf %161 : vector<8x128xf32> to vector<8x128xbf16>
    %c0_66 = arith.constant 0 : index
    %c0_67 = arith.constant 0 : index
    %c0_68 = arith.constant 0 : index
    %163 = vector.load %arg14[%c0_66, %c0_67, %c0_68] : memref<1x128x32xbf16, #tpu.memory_space<vmem>>, vector<1x128x32xbf16>
    %164 = vector.shape_cast %163 : vector<1x128x32xbf16> to vector<128x32xbf16>
    %cst_69 = arith.constant dense<0.000000e+00> : vector<8x32xf32>
    %165 = tpu.matmul %162, %164, %cst_69 {dimension_numbers = #tpu.dot_dimension_numbers<[1], [0], [0], [1], [0, 0, 1, 1], [], []>} : vector<8x128xbf16>, vector<128x32xbf16>, vector<8x32xf32> -> vector<8x32xf32>
    %c0_70 = arith.constant 0 : index
    %c0_71 = arith.constant 0 : index
    %c0_72 = arith.constant 0 : index
    %166 = vector.load %arg15[%c0_70, %c0_71, %c0_72] : memref<1x1x32xf32, #tpu.memory_space<vmem>>, vector<1x1x32xf32>
    %167 = vector.shape_cast %166 : vector<1x1x32xf32> to vector<1x32xf32>
    %168 = vector.broadcast %167 : vector<1x32xf32> to vector<8x32xf32>
    %169 = arith.addf %165, %168 : vector<8x32xf32>
    %170 = arith.addf %169, %151 : vector<8x32xf32>
    %c0_73 = arith.constant 0 : index
    %c0_74 = arith.constant 0 : index
    %c0_75 = arith.constant 0 : index
    %171 = vector.load %arg10[%c0_73, %c0_74, %c0_75] : memref<1x1x32xf32, #tpu.memory_space<vmem>>, vector<1x1x32xf32>
    %172 = vector.shape_cast %171 : vector<1x1x32xf32> to vector<1x32xf32>
    %c0_76 = arith.constant 0 : index
    %c0_77 = arith.constant 0 : index
    %c0_78 = arith.constant 0 : index
    %173 = vector.load %arg11[%c0_76, %c0_77, %c0_78] : memref<1x1x32xf32, #tpu.memory_space<vmem>>, vector<1x1x32xf32>
    %174 = vector.shape_cast %173 : vector<1x1x32xf32> to vector<1x32xf32>
    %cst_79 = arith.constant dense<0.000000e+00> : vector<8xf32>
    %175 = vector.multi_reduction <add>, %170, %cst_79 [1] : vector<8x32xf32> to vector<8xf32>
    %176 = vector.shape_cast %175 : vector<8xf32> to vector<8x1xf32>
    %cst_80 = arith.constant 3.200000e+01 : f32
    %177 = vector.broadcast %cst_80 : f32 to vector<8x1xf32>
    %178 = arith.divf %176, %177 : vector<8x1xf32>
    %179 = vector.broadcast %178 : vector<8x1xf32> to vector<8x32xf32>
    %180 = arith.subf %170, %179 : vector<8x32xf32>
    %181 = arith.mulf %180, %180 : vector<8x32xf32>
    %cst_81 = arith.constant dense<0.000000e+00> : vector<8xf32>
    %182 = vector.multi_reduction <add>, %181, %cst_81 [1] : vector<8x32xf32> to vector<8xf32>
    %183 = vector.shape_cast %182 : vector<8xf32> to vector<8x1xf32>
    %cst_82 = arith.constant 3.200000e+01 : f32
    %184 = vector.broadcast %cst_82 : f32 to vector<8x1xf32>
    %185 = arith.divf %183, %184 : vector<8x1xf32>
    %186 = vector.broadcast %178 : vector<8x1xf32> to vector<8x32xf32>
    %187 = arith.subf %170, %186 : vector<8x32xf32>
    %cst_83 = arith.constant 9.99999974E-6 : f32
    %188 = vector.broadcast %cst_83 : f32 to vector<8x1xf32>
    %189 = arith.addf %185, %188 : vector<8x1xf32>
    %190 = math.rsqrt %189 : vector<8x1xf32>
    %191 = vector.broadcast %190 : vector<8x1xf32> to vector<8x32xf32>
    %192 = arith.mulf %187, %191 : vector<8x32xf32>
    %193 = vector.broadcast %172 : vector<1x32xf32> to vector<8x32xf32>
    %194 = arith.mulf %192, %193 : vector<8x32xf32>
    %195 = vector.broadcast %174 : vector<1x32xf32> to vector<8x32xf32>
    %196 = arith.addf %194, %195 : vector<8x32xf32>
    %c0_84 = arith.constant 0 : index
    %c0_85 = arith.constant 0 : index
    %197 = vector.load %arg16[%c0_84, %c0_85] : memref<8x32xf32, #tpu.memory_space<vmem>>, vector<8x32xf32>
    tpu.vector_store %arg16[%c0_84, %c0_85], %196 {strides = array<i32>} : memref<8x32xf32, #tpu.memory_space<vmem>>, vector<8x32xf32>,
    return
  }
  func.func @transform_0(%arg0: i32, %arg1: i32) -> (i32, i32) {
    %c0_i32 = arith.constant 0 : i32
    %c0_i32_0 = arith.constant 0 : i32
    return %arg0, %c0_i32 : i32, i32
  }
  func.func @transform_1(%arg0: i32, %arg1: i32) -> (i32, i32, i32) {
    %c0_i32 = arith.constant 0 : i32
    %c0_i32_0 = arith.constant 0 : i32
    %c0_i32_1 = arith.constant 0 : i32
    return %arg0, %c0_i32, %c0_i32_0 : i32, i32, i32
  }
  func.func @transform_2(%arg0: i32, %arg1: i32) -> (i32, i32, i32) {
    %c0_i32 = arith.constant 0 : i32
    %c0_i32_0 = arith.constant 0 : i32
    %c0_i32_1 = arith.constant 0 : i32
    return %arg1, %c0_i32, %c0_i32_0 : i32, i32, i32
  }
  func.func @transform_3(%arg0: i32, %arg1: i32) -> (i32, i32, i32) {
    %c0_i32 = arith.constant 0 : i32
    %c0_i32_0 = arith.constant 0 : i32
    %c0_i32_1 = arith.constant 0 : i32
    return %arg1, %c0_i32, %c0_i32_0 : i32, i32, i32
  }
  func.func @transform_4(%arg0: i32, %arg1: i32) -> (i32, i32, i32, i32) {
    %c0_i32 = arith.constant 0 : i32
    %c0_i32_0 = arith.constant 0 : i32
    %c0_i32_1 = arith.constant 0 : i32
    %c0_i32_2 = arith.constant 0 : i32
    return %arg1, %c0_i32, %c0_i32_0, %c0_i32_1 : i32, i32, i32, i32
  }
  func.func @transform_5(%arg0: i32, %arg1: i32) -> (i32, i32, i32) {
    %c0_i32 = arith.constant 0 : i32
    %c0_i32_0 = arith.constant 0 : i32
    %c0_i32_1 = arith.constant 0 : i32
    return %arg1, %c0_i32, %c0_i32_0 : i32, i32, i32
  }
  func.func @transform_6(%arg0: i32, %arg1: i32) -> (i32, i32, i32) {
    %c0_i32 = arith.constant 0 : i32
    %c0_i32_0 = arith.constant 0 : i32
    %c0_i32_1 = arith.constant 0 : i32
    return %arg1, %c0_i32, %c0_i32_0 : i32, i32, i32
  }
  func.func @transform_7(%arg0: i32, %arg1: i32) -> (i32, i32, i32) {
    %c0_i32 = arith.constant 0 : i32
    %c0_i32_0 = arith.constant 0 : i32
    %c0_i32_1 = arith.constant 0 : i32
    return %arg1, %c0_i32, %c0_i32_0 : i32, i32, i32
  }
  func.func @transform_8(%arg0: i32, %arg1: i32) -> (i32, i32, i32) {
    %c0_i32 = arith.constant 0 : i32
    %c0_i32_0 = arith.constant 0 : i32
    %c0_i32_1 = arith.constant 0 : i32
    return %arg1, %c0_i32, %c0_i32_0 : i32, i32, i32
  }
  func.func @transform_9(%arg0: i32, %arg1: i32) -> (i32, i32, i32) {
    %c0_i32 = arith.constant 0 : i32
    %c0_i32_0 = arith.constant 0 : i32
    %c0_i32_1 = arith.constant 0 : i32
    return %arg1, %c0_i32, %c0_i32_0 : i32, i32, i32
  }
  func.func @transform_10(%arg0: i32, %arg1: i32) -> (i32, i32, i32) {
    %c0_i32 = arith.constant 0 : i32
    %c0_i32_0 = arith.constant 0 : i32
    %c0_i32_1 = arith.constant 0 : i32
    return %arg1, %c0_i32, %c0_i32_0 : i32, i32, i32
  }
  func.func @transform_11(%arg0: i32, %arg1: i32) -> (i32, i32, i32) {
    %c0_i32 = arith.constant 0 : i32
    %c0_i32_0 = arith.constant 0 : i32
    %c0_i32_1 = arith.constant 0 : i32
    return %arg1, %c0_i32, %c0_i32_0 : i32, i32, i32
  }
  func.func @transform_12(%arg0: i32, %arg1: i32) -> (i32, i32, i32) {
    %c0_i32 = arith.constant 0 : i32
    %c0_i32_0 = arith.constant 0 : i32
    %c0_i32_1 = arith.constant 0 : i32
    return %arg1, %c0_i32, %c0_i32_0 : i32, i32, i32
  }
  func.func @transform_13(%arg0: i32, %arg1: i32) -> (i32, i32, i32) {
    %c0_i32 = arith.constant 0 : i32
    %c0_i32_0 = arith.constant 0 : i32
    %c0_i32_1 = arith.constant 0 : i32
    return %arg1, %c0_i32, %c0_i32_0 : i32, i32, i32
  }
  func.func @transform_14(%arg0: i32, %arg1: i32) -> (i32, i32) {
    %c0_i32 = arith.constant 0 : i32
    %c0_i32_0 = arith.constant 0 : i32
    return %arg0, %c0_i32 : i32, i32
  }
}

</mosaic_0001>

<llo_original>
// kernel: tpu_custom_call.1
$region0: #{tpu_custom_call.1}
  #allocation0 [shape = 'u32[]', space=smem, size = 0x4, offset = 0x4, fixed_abs, tag = 'smem constant byte address 0x4 - core index']
  #allocation1 [shape = 'u32[144,128]{1,0:T(1,128)}', space=vmem, size = 0x12000, scoped, tag = 'internal scratch']
  %s0 = inlined_call_operand.vmem [shape: f32[16,32], index: 0, kind: input, shape index: {}]
  %s1 = inlined_call_operand.vmem [shape: f32[2,1,8], index: 1, kind: input, shape index: {}]
  %s2 = inlined_call_operand.vmem [shape: bf16[2,32,96], index: 2, kind: input, shape index: {}]
  %s3 = inlined_call_operand.vmem [shape: f32[2,1,96], index: 3, kind: input, shape index: {}]
  %s4 = inlined_call_operand.vmem [shape: bf16[2,4,8,32], index: 4, kind: input, shape index: {}]
  %s5 = inlined_call_operand.vmem [shape: f32[2,1,32], index: 5, kind: input, shape index: {}]
  %s6 = inlined_call_operand.vmem [shape: f32[2,1,32], index: 6, kind: input, shape index: {}]
  %s7 = inlined_call_operand.vmem [shape: f32[2,1,32], index: 7, kind: input, shape index: {}]
  %s8 = inlined_call_operand.vmem [shape: f32[2,1,32], index: 8, kind: input, shape index: {}]
  %s9 = inlined_call_operand.vmem [shape: f32[2,1,32], index: 9, kind: input, shape index: {}]
  %s10 = inlined_call_operand.vmem [shape: bf16[2,32,128], index: 10, kind: input, shape index: {}]
  %s11 = inlined_call_operand.vmem [shape: f32[2,1,128], index: 11, kind: input, shape index: {}]
  %s12 = inlined_call_operand.vmem [shape: bf16[2,128,32], index: 12, kind: input, shape index: {}]
  %s13 = inlined_call_operand.vmem [shape: f32[2,1,32], index: 13, kind: input, shape index: {}]
  %s14 = inlined_call_operand.hbm [shape: f32[16,32], index: 14, kind: output, shape index: {}]
  %s15 = sld [smem:[#allocation0]]
  $region93: #{tpu_custom_call.1} parent=0
    _
  %s17 = ssub.s32 1, %s15
  %s18 = scalar_select 0, %s17, %s15
  $region1: #{tpu_custom_call.1} parent=0
    #allocation2 [shape = 'u8[8192]{0}', space=vmem, size = 0x2000, scoped, tag = 'output window, operand 0']
    #allocation3 [shape = 's32[2]{0}', space=sflag, size = 0x8, scoped, tag = 'scoped memory for tpu_custom_call.1']
    %19 = vsyncpa [#allocation3], 0
    %s20 = scalar_lea.sflag [#allocation3], 1
    %21 = vsyncpa %s20, 0
    loop: start=0, step=1, limit=6
    $region2: #{tpu_custom_call.1} parent=1 // loop_pre_header
      _
    $region3: #{tpu_custom_call.1} parent=1 // loop_header
      %s23 = sphi 0, %s27
      %p24 = scmp.ge.s32.totalorder %s23, 6
      %s30 = sphi 0, %s42
      %s31 = sphi 0, %s38
      %s32 = sphi 0, %s30
      %s33 = sphi 0, %s31
      %s34 = sphi 0, %s32
      %s35 = sphi 0, %s33
      %s45 = sphi 0, %s47
      %s48 = sphi 0, %s45
      %s49 = sphi 0, %s48
      %s65 = sphi 0, %s49
      %s71 = sphi 0, %s73
      %s74 = sphi 0, %s71
      %s75 = sphi 0, %s74
      %s91 = sphi 0, %s75
      %s97 = sphi 0, %s99
      %s100 = sphi 0, %s97
      %s101 = sphi 0, %s100
      %s117 = sphi 0, %s101
      %s123 = sphi 0, %s125
      %s126 = sphi 0, %s123
      %s127 = sphi 0, %s126
      %s143 = sphi 0, %s127
      %s149 = sphi 0, %s151
      %s152 = sphi 0, %s149
      %s153 = sphi 0, %s152
      %s169 = sphi 0, %s153
      %s175 = sphi 0, %s177
      %s178 = sphi 0, %s175
      %s179 = sphi 0, %s178
      %s195 = sphi 0, %s179
      %s201 = sphi 0, %s203
      %s204 = sphi 0, %s201
      %s205 = sphi 0, %s204
      %s221 = sphi 0, %s205
      %s227 = sphi 0, %s229
      %s230 = sphi 0, %s227
      %s231 = sphi 0, %s230
      %s247 = sphi 0, %s231
      %s253 = sphi 0, %s255
      %s256 = sphi 0, %s253
      %s257 = sphi 0, %s256
      %s273 = sphi 0, %s257
      %s279 = sphi 0, %s281
      %s282 = sphi 0, %s279
      %s283 = sphi 0, %s282
      %s299 = sphi 0, %s283
      %s305 = sphi 0, %s307
      %s308 = sphi 0, %s305
      %s309 = sphi 0, %s308
      %s325 = sphi 0, %s309
      %s331 = sphi 0, %s333
      %s334 = sphi 0, %s331
      %s335 = sphi 0, %s334
      %s351 = sphi 0, %s335
      %s357 = sphi 0, %s359
      %s360 = sphi 0, %s357
      %s361 = sphi 0, %s360
      %s377 = sphi 0, %s361
      %s383 = sphi 0, %s385
      %s386 = sphi 0, %s383
      %s387 = sphi 0, %s386
      %s403 = sphi 0, %s387
      %s409 = sphi 0, %s411
      %s412 = sphi 0, %s409
      %s413 = sphi 0, %s412
      %s429 = sphi 0, %s413
    $region4: #{tpu_custom_call.1} parent=1 // loop_header_branch
      %26 = sbr.rel (%p24) target = $region8
    $region5: #{tpu_custom_call.1} parent=1 // loop_body
      %s28 = ssub.s32 %s23, 1
      %s29 = ssub.s32 %s23, 2
      %s36 = sadd.s32 1, %s31
      %p37 = scmp.ge.s32.totalorder %s36, 2
      %s38 = scalar_select %p37, 0, %s36
      %s39 = sadd.s32 1, %s30
      %s40 = scalar_select %p37, %s39, %s30
      %p41 = scmp.ge.s32.totalorder %s40, 2
      %s42 = scalar_select %p41, 0, %s40
      %s43 = ssub.s32 %s30, %s42
      %p44 = scmp.eq.s32.totalorder %s43, 0
      %s46 = sadd.s32 %s45, 1
      %s47 = scalar_select %p44, %s45, %s46
      %p50 = pneg %p44
      %p51 = scmp.eq.s32.totalorder %s23, 3
      %p52 = por %p50, %p51
      %p53 = scmp.ne.s32.totalorder %s45, %s48
      %p54 = scmp.eq.s32.totalorder %s23, 0
      %p55 = por %p53, %p54
      %p56 = scmp.ne.s32.totalorder %s45, %s48
      %p57 = scmp.eq.s32.totalorder %s28, 3
      %p58 = por %p56, %p57
      %p59 = scmp.ne.s32.totalorder %s48, %s49
      %p60 = scmp.eq.s32.totalorder %s28, 0
      %p61 = por %p59, %p60
      %p62 = scmp.ne.s32.totalorder %s48, %s49
      %p63 = scmp.eq.s32.totalorder %s29, 3
      %p64 = por %p62, %p63
      %p66 = scmp.ne.s32.totalorder %s49, %s65
      %p67 = scmp.eq.s32.totalorder %s29, 0
      %p68 = por %p66, %p67
      %s69 = ssub.s32 %s30, %s42
      %p70 = scmp.eq.s32.totalorder %s69, 0
      %s72 = sadd.s32 %s71, 1
      %s73 = scalar_select %p70, %s71, %s72
      %p76 = pneg %p70
      %p77 = scmp.eq.s32.totalorder %s23, 3
      %p78 = por %p76, %p77
      %p79 = scmp.ne.s32.totalorder %s71, %s74
      %p80 = scmp.eq.s32.totalorder %s23, 0
      %p81 = por %p79, %p80
      %p82 = scmp.ne.s32.totalorder %s71, %s74
      %p83 = scmp.eq.s32.totalorder %s28, 3
      %p84 = por %p82, %p83
      %p85 = scmp.ne.s32.totalorder %s74, %s75
      %p86 = scmp.eq.s32.totalorder %s28, 0
      %p87 = por %p85, %p86
      %p88 = scmp.ne.s32.totalorder %s74, %s75
      %p89 = scmp.eq.s32.totalorder %s29, 3
      %p90 = por %p88, %p89
      %p92 = scmp.ne.s32.totalorder %s75, %s91
      %p93 = scmp.eq.s32.totalorder %s29, 0
      %p94 = por %p92, %p93
      %s95 = ssub.s32 %s31, %s38
      %p96 = scmp.eq.s32.totalorder %s95, 0
      %s98 = sadd.s32 %s97, 1
      %s99 = scalar_select %p96, %s97, %s98
      %p102 = pneg %p96
      %p103 = scmp.eq.s32.totalorder %s23, 3
      %p104 = por %p102, %p103
      %p105 = scmp.ne.s32.totalorder %s97, %s100
      %p106 = scmp.eq.s32.totalorder %s23, 0
      %p107 = por %p105, %p106
      %p108 = scmp.ne.s32.totalorder %s97, %s100
      %p109 = scmp.eq.s32.totalorder %s28, 3
      %p110 = por %p108, %p109
      %p111 = scmp.ne.s32.totalorder %s100, %s101
      %p112 = scmp.eq.s32.totalorder %s28, 0
      %p113 = por %p111, %p112
      %p114 = scmp.ne.s32.totalorder %s100, %s101
      %p115 = scmp.eq.s32.totalorder %s29, 3
      %p116 = por %p114, %p115
      %p118 = scmp.ne.s32.totalorder %s101, %s117
      %p119 = scmp.eq.s32.totalorder %s29, 0
      %p120 = por %p118, %p119
      %s121 = ssub.s32 %s31, %s38
      %p122 = scmp.eq.s32.totalorder %s121, 0
      %s124 = sadd.s32 %s123, 1
      %s125 = scalar_select %p122, %s123, %s124
      %p128 = pneg %p122
      %p129 = scmp.eq.s32.totalorder %s23, 3
      %p130 = por %p128, %p129
      %p131 = scmp.ne.s32.totalorder %s123, %s126
      %p132 = scmp.eq.s32.totalorder %s23, 0
      %p133 = por %p131, %p132
      %p134 = scmp.ne.s32.totalorder %s123, %s126
      %p135 = scmp.eq.s32.totalorder %s28, 3
      %p136 = por %p134, %p135
      %p137 = scmp.ne.s32.totalorder %s126, %s127
      %p138 = scmp.eq.s32.totalorder %s28, 0
      %p139 = por %p137, %p138
      %p140 = scmp.ne.s32.totalorder %s126, %s127
      %p141 = scmp.eq.s32.totalorder %s29, 3
      %p142 = por %p140, %p141
      %p144 = scmp.ne.s32.totalorder %s127, %s143
      %p145 = scmp.eq.s32.totalorder %s29, 0
      %p146 = por %p144, %p145
      %s147 = ssub.s32 %s31, %s38
      %p148 = scmp.eq.s32.totalorder %s147, 0
      %s150 = sadd.s32 %s149, 1
      %s151 = scalar_select %p148, %s149, %s150
      %p154 = pneg %p148
      %p155 = scmp.eq.s32.totalorder %s23, 3
      %p156 = por %p154, %p155
      %p157 = scmp.ne.s32.totalorder %s149, %s152
      %p158 = scmp.eq.s32.totalorder %s23, 0
      %p159 = por %p157, %p158
      %p160 = scmp.ne.s32.totalorder %s149, %s152
      %p161 = scmp.eq.s32.totalorder %s28, 3
      %p162 = por %p160, %p161
      %p163 = scmp.ne.s32.totalorder %s152, %s153
      %p164 = scmp.eq.s32.totalorder %s28, 0
      %p165 = por %p163, %p164
      %p166 = scmp.ne.s32.totalorder %s152, %s153
      %p167 = scmp.eq.s32.totalorder %s29, 3
      %p168 = por %p166, %p167
      %p170 = scmp.ne.s32.totalorder %s153, %s169
      %p171 = scmp.eq.s32.totalorder %s29, 0
      %p172 = por %p170, %p171
      %s173 = ssub.s32 %s31, %s38
      %p174 = scmp.eq.s32.totalorder %s173, 0
      %s176 = sadd.s32 %s175, 1
      %s177 = scalar_select %p174, %s175, %s176
      %p180 = pneg %p174
      %p181 = scmp.eq.s32.totalorder %s23, 3
      %p182 = por %p180, %p181
      %p183 = scmp.ne.s32.totalorder %s175, %s178
      %p184 = scmp.eq.s32.totalorder %s23, 0
      %p185 = por %p183, %p184
      %p186 = scmp.ne.s32.totalorder %s175, %s178
      %p187 = scmp.eq.s32.totalorder %s28, 3
      %p188 = por %p186, %p187
      %p189 = scmp.ne.s32.totalorder %s178, %s179
      %p190 = scmp.eq.s32.totalorder %s28, 0
      %p191 = por %p189, %p190
      %p192 = scmp.ne.s32.totalorder %s178, %s179
      %p193 = scmp.eq.s32.totalorder %s29, 3
      %p194 = por %p192, %p193
      %p196 = scmp.ne.s32.totalorder %s179, %s195
      %p197 = scmp.eq.s32.totalorder %s29, 0
      %p198 = por %p196, %p197
      %s199 = ssub.s32 %s31, %s38
      %p200 = scmp.eq.s32.totalorder %s199, 0
      %s202 = sadd.s32 %s201, 1
      %s203 = scalar_select %p200, %s201, %s202
      %p206 = pneg %p200
      %p207 = scmp.eq.s32.totalorder %s23, 3
      %p208 = por %p206, %p207
      %p209 = scmp.ne.s32.totalorder %s201, %s204
      %p210 = scmp.eq.s32.totalorder %s23, 0
      %p211 = por %p209, %p210
      %p212 = scmp.ne.s32.totalorder %s201, %s204
      %p213 = scmp.eq.s32.totalorder %s28, 3
      %p214 = por %p212, %p213
      %p215 = scmp.ne.s32.totalorder %s204, %s205
      %p216 = scmp.eq.s32.totalorder %s28, 0
      %p217 = por %p215, %p216
      %p218 = scmp.ne.s32.totalorder %s204, %s205
      %p219 = scmp.eq.s32.totalorder %s29, 3
      %p220 = por %p218, %p219
      %p222 = scmp.ne.s32.totalorder %s205, %s221
      %p223 = scmp.eq.s32.totalorder %s29, 0
      %p224 = por %p222, %p223
      %s225 = ssub.s32 %s31, %s38
      %p226 = scmp.eq.s32.totalorder %s225, 0
      %s228 = sadd.s32 %s227, 1
      %s229 = scalar_select %p226, %s227, %s228
      %p232 = pneg %p226
      %p233 = scmp.eq.s32.totalorder %s23, 3
      %p234 = por %p232, %p233
      %p235 = scmp.ne.s32.totalorder %s227, %s230
      %p236 = scmp.eq.s32.totalorder %s23, 0
      %p237 = por %p235, %p236
      %p238 = scmp.ne.s32.totalorder %s227, %s230
      %p239 = scmp.eq.s32.totalorder %s28, 3
      %p240 = por %p238, %p239
      %p241 = scmp.ne.s32.totalorder %s230, %s231
      %p242 = scmp.eq.s32.totalorder %s28, 0
      %p243 = por %p241, %p242
      %p244 = scmp.ne.s32.totalorder %s230, %s231
      %p245 = scmp.eq.s32.totalorder %s29, 3
      %p246 = por %p244, %p245
      %p248 = scmp.ne.s32.totalorder %s231, %s247
      %p249 = scmp.eq.s32.totalorder %s29, 0
      %p250 = por %p248, %p249
      %s251 = ssub.s32 %s31, %s38
      %p252 = scmp.eq.s32.totalorder %s251, 0
      %s254 = sadd.s32 %s253, 1
      %s255 = scalar_select %p252, %s253, %s254
      %p258 = pneg %p252
      %p259 = scmp.eq.s32.totalorder %s23, 3
      %p260 = por %p258, %p259
      %p261 = scmp.ne.s32.totalorder %s253, %s256
      %p262 = scmp.eq.s32.totalorder %s23, 0
      %p263 = por %p261, %p262
      %p264 = scmp.ne.s32.totalorder %s253, %s256
      %p265 = scmp.eq.s32.totalorder %s28, 3
      %p266 = por %p264, %p265
      %p267 = scmp.ne.s32.totalorder %s256, %s257
      %p268 = scmp.eq.s32.totalorder %s28, 0
      %p269 = por %p267, %p268
      %p270 = scmp.ne.s32.totalorder %s256, %s257
      %p271 = scmp.eq.s32.totalorder %s29, 3
      %p272 = por %p270, %p271
      %p274 = scmp.ne.s32.totalorder %s257, %s273
      %p275 = scmp.eq.s32.totalorder %s29, 0
      %p276 = por %p274, %p275
      %s277 = ssub.s32 %s31, %s38
      %p278 = scmp.eq.s32.totalorder %s277, 0
      %s280 = sadd.s32 %s279, 1
      %s281 = scalar_select %p278, %s279, %s280
      %p284 = pneg %p278
      %p285 = scmp.eq.s32.totalorder %s23, 3
      %p286 = por %p284, %p285
      %p287 = scmp.ne.s32.totalorder %s279, %s282
      %p288 = scmp.eq.s32.totalorder %s23, 0
      %p289 = por %p287, %p288
      %p290 = scmp.ne.s32.totalorder %s279, %s282
      %p291 = scmp.eq.s32.totalorder %s28, 3
      %p292 = por %p290, %p291
      %p293 = scmp.ne.s32.totalorder %s282, %s283
      %p294 = scmp.eq.s32.totalorder %s28, 0
      %p295 = por %p293, %p294
      %p296 = scmp.ne.s32.totalorder %s282, %s283
      %p297 = scmp.eq.s32.totalorder %s29, 3
      %p298 = por %p296, %p297
      %p300 = scmp.ne.s32.totalorder %s283, %s299
      %p301 = scmp.eq.s32.totalorder %s29, 0
      %p302 = por %p300, %p301
      %s303 = ssub.s32 %s31, %s38
      %p304 = scmp.eq.s32.totalorder %s303, 0
      %s306 = sadd.s32 %s305, 1
      %s307 = scalar_select %p304, %s305, %s306
      %p310 = pneg %p304
      %p311 = scmp.eq.s32.totalorder %s23, 3
      %p312 = por %p310, %p311
      %p313 = scmp.ne.s32.totalorder %s305, %s308
      %p314 = scmp.eq.s32.totalorder %s23, 0
      %p315 = por %p313, %p314
      %p316 = scmp.ne.s32.totalorder %s305, %s308
      %p317 = scmp.eq.s32.totalorder %s28, 3
      %p318 = por %p316, %p317
      %p319 = scmp.ne.s32.totalorder %s308, %s309
      %p320 = scmp.eq.s32.totalorder %s28, 0
      %p321 = por %p319, %p320
      %p322 = scmp.ne.s32.totalorder %s308, %s309
      %p323 = scmp.eq.s32.totalorder %s29, 3
      %p324 = por %p322, %p323
      %p326 = scmp.ne.s32.totalorder %s309, %s325
      %p327 = scmp.eq.s32.totalorder %s29, 0
      %p328 = por %p326, %p327
      %s329 = ssub.s32 %s31, %s38
      %p330 = scmp.eq.s32.totalorder %s329, 0
      %s332 = sadd.s32 %s331, 1
      %s333 = scalar_select %p330, %s331, %s332
      %p336 = pneg %p330
      %p337 = scmp.eq.s32.totalorder %s23, 3
      %p338 = por %p336, %p337
      %p339 = scmp.ne.s32.totalorder %s331, %s334
      %p340 = scmp.eq.s32.totalorder %s23, 0
      %p341 = por %p339, %p340
      %p342 = scmp.ne.s32.totalorder %s331, %s334
      %p343 = scmp.eq.s32.totalorder %s28, 3
      %p344 = por %p342, %p343
      %p345 = scmp.ne.s32.totalorder %s334, %s335
      %p346 = scmp.eq.s32.totalorder %s28, 0
      %p347 = por %p345, %p346
      %p348 = scmp.ne.s32.totalorder %s334, %s335
      %p349 = scmp.eq.s32.totalorder %s29, 3
      %p350 = por %p348, %p349
      %p352 = scmp.ne.s32.totalorder %s335, %s351
      %p353 = scmp.eq.s32.totalorder %s29, 0
      %p354 = por %p352, %p353
      %s355 = ssub.s32 %s31, %s38
      %p356 = scmp.eq.s32.totalorder %s355, 0
      %s358 = sadd.s32 %s357, 1
      %s359 = scalar_select %p356, %s357, %s358
      %p362 = pneg %p356
      %p363 = scmp.eq.s32.totalorder %s23, 3
      %p364 = por %p362, %p363
      %p365 = scmp.ne.s32.totalorder %s357, %s360
      %p366 = scmp.eq.s32.totalorder %s23, 0
      %p367 = por %p365, %p366
      %p368 = scmp.ne.s32.totalorder %s357, %s360
      %p369 = scmp.eq.s32.totalorder %s28, 3
      %p370 = por %p368, %p369
      %p371 = scmp.ne.s32.totalorder %s360, %s361
      %p372 = scmp.eq.s32.totalorder %s28, 0
      %p373 = por %p371, %p372
      %p374 = scmp.ne.s32.totalorder %s360, %s361
      %p375 = scmp.eq.s32.totalorder %s29, 3
      %p376 = por %p374, %p375
      %p378 = scmp.ne.s32.totalorder %s361, %s377
      %p379 = scmp.eq.s32.totalorder %s29, 0
      %p380 = por %p378, %p379
      %s381 = ssub.s32 %s31, %s38
      %p382 = scmp.eq.s32.totalorder %s381, 0
      %s384 = sadd.s32 %s383, 1
      %s385 = scalar_select %p382, %s383, %s384
      %p388 = pneg %p382
      %p389 = scmp.eq.s32.totalorder %s23, 3
      %p390 = por %p388, %p389
      %p391 = scmp.ne.s32.totalorder %s383, %s386
      %p392 = scmp.eq.s32.totalorder %s23, 0
      %p393 = por %p391, %p392
      %p394 = scmp.ne.s32.totalorder %s383, %s386
      %p395 = scmp.eq.s32.totalorder %s28, 3
      %p396 = por %p394, %p395
      %p397 = scmp.ne.s32.totalorder %s386, %s387
      %p398 = scmp.eq.s32.totalorder %s28, 0
      %p399 = por %p397, %p398
      %p400 = scmp.ne.s32.totalorder %s386, %s387
      %p401 = scmp.eq.s32.totalorder %s29, 3
      %p402 = por %p400, %p401
      %p404 = scmp.ne.s32.totalorder %s387, %s403
      %p405 = scmp.eq.s32.totalorder %s29, 0
      %p406 = por %p404, %p405
      %s407 = ssub.s32 %s30, %s42
      %p408 = scmp.eq.s32.totalorder %s407, 0
      %s410 = sadd.s32 %s409, 1
      %s411 = scalar_select %p408, %s409, %s410
      %p414 = pneg %p408
      %p415 = scmp.eq.s32.totalorder %s23, 3
      %p416 = por %p414, %p415
      %p417 = scmp.ne.s32.totalorder %s409, %s412
      %p418 = scmp.eq.s32.totalorder %s23, 0
      %p419 = por %p417, %p418
      %p420 = scmp.ne.s32.totalorder %s409, %s412
      %p421 = scmp.eq.s32.totalorder %s28, 3
      %p422 = por %p420, %p421
      %p423 = scmp.ne.s32.totalorder %s412, %s413
      %p424 = scmp.eq.s32.totalorder %s28, 0
      %p425 = por %p423, %p424
      %p426 = scmp.ne.s32.totalorder %s412, %s413
      %p427 = scmp.eq.s32.totalorder %s29, 3
      %p428 = por %p426, %p427
      %p430 = scmp.ne.s32.totalorder %s413, %s429
      %p431 = scmp.eq.s32.totalorder %s29, 0
      %p432 = por %p430, %p431
      %p433 = scmp.le.s32.totalorder 1, %s23
      %p434 = scmp.lt.s32.totalorder %s23, 5
      %p435 = pnand %p433, %p434
      %p436 = pneg %p435
      // Predicated region
      $region9: #{tpu_custom_call.1} parent=5 // pred_check
        _
      $region10: #{tpu_custom_call.1} parent=5 // pred_check_branch
        %438 = sbr.rel (%p435) target = $region12
      $region11: #{tpu_custom_call.1} parent=5 // pred_region
        %s439 = ssub.s32 %s23, 1
      $region12: #{tpu_custom_call.1} parent=5 // pred_fallthru
        _
      %p440 = scmp.lt.s32.totalorder %s23, 4
      // Predicated region
      $region13: #{tpu_custom_call.1} parent=5 // pred_check
        %p441 = pneg %p440
      $region14: #{tpu_custom_call.1} parent=5 // pred_check_branch
        %443 = sbr.rel (%p441) target = $region16
      $region15: #{tpu_custom_call.1} parent=5 // pred_region
        // Predicated region
        $region17: #{tpu_custom_call.1} parent=15 // pred_check
          %p444 = pneg %p55
        $region18: #{tpu_custom_call.1} parent=15 // pred_check_branch
          %446 = sbr.rel (%p444) target = $region20
        $region19: #{tpu_custom_call.1} parent=15 // pred_region
          %p447 = scmp.lt.s32.totalorder %s30, 1
          %s448 = scalar_select %p447, %s30, 1
          %s449 = smul.addr %s448, 8
          %s450 = scalar_lea.vmem %s0, %s449
        $region20: #{tpu_custom_call.1} parent=15 // pred_fallthru
          _
        // Predicated region
        $region21: #{tpu_custom_call.1} parent=15 // pred_check
          %p451 = pneg %p81
        $region22: #{tpu_custom_call.1} parent=15 // pred_check_branch
          %453 = sbr.rel (%p451) target = $region24
        $region23: #{tpu_custom_call.1} parent=15 // pred_region
          %p454 = scmp.lt.s32.totalorder %s30, 1
          %s455 = scalar_select %p454, %s30, 1
          %s456 = scalar_lea.vmem %s1, %s455
        $region24: #{tpu_custom_call.1} parent=15 // pred_fallthru
          _
        // Predicated region
        $region25: #{tpu_custom_call.1} parent=15 // pred_check
          %p457 = pneg %p107
        $region26: #{tpu_custom_call.1} parent=15 // pred_check_branch
          %459 = sbr.rel (%p457) target = $region28
        $region27: #{tpu_custom_call.1} parent=15 // pred_region
          %p460 = scmp.lt.s32.totalorder %s31, 1
          %s461 = scalar_select %p460, %s31, 1
          %s462 = smul.addr %s461, 4
          %s463 = smul.addr %s462, 4
          %s464 = scalar_lea.vmem %s2, %s463
        $region28: #{tpu_custom_call.1} parent=15 // pred_fallthru
          _
        // Predicated region
        $region29: #{tpu_custom_call.1} parent=15 // pred_check
          %p465 = pneg %p133
        $region30: #{tpu_custom_call.1} parent=15 // pred_check_branch
          %467 = sbr.rel (%p465) target = $region32
        $region31: #{tpu_custom_call.1} parent=15 // pred_region
          %p468 = scmp.lt.s32.totalorder %s31, 1
          %s469 = scalar_select %p468, %s31, 1
          %s470 = scalar_lea.vmem %s3, %s469
        $region32: #{tpu_custom_call.1} parent=15 // pred_fallthru
          _
        // Predicated region
        $region33: #{tpu_custom_call.1} parent=15 // pred_check
          %p471 = pneg %p159
        $region34: #{tpu_custom_call.1} parent=15 // pred_check_branch
          %473 = sbr.rel (%p471) target = $region36
        $region35: #{tpu_custom_call.1} parent=15 // pred_region
          %p474 = scmp.lt.s32.totalorder %s31, 1
          %s475 = scalar_select %p474, %s31, 1
          %s476 = smul.addr %s475, 4
          %s477 = smul.addr %s476, 4
          %s478 = scalar_lea.vmem %s4, %s477
        $region36: #{tpu_custom_call.1} parent=15 // pred_fallthru
          _
        // Predicated region
        $region37: #{tpu_custom_call.1} parent=15 // pred_check
          %p479 = pneg %p185
        $region38: #{tpu_custom_call.1} parent=15 // pred_check_branch
          %481 = sbr.rel (%p479) target = $region40
        $region39: #{tpu_custom_call.1} parent=15 // pred_region
          %p482 = scmp.lt.s32.totalorder %s31, 1
          %s483 = scalar_select %p482, %s31, 1
          %s484 = scalar_lea.vmem %s5, %s483
        $region40: #{tpu_custom_call.1} parent=15 // pred_fallthru
          _
        // Predicated region
        $region41: #{tpu_custom_call.1} parent=15 // pred_check
          %p485 = pneg %p211
        $region42: #{tpu_custom_call.1} parent=15 // pred_check_branch
          %487 = sbr.rel (%p485) target = $region44
        $region43: #{tpu_custom_call.1} parent=15 // pred_region
          %p488 = scmp.lt.s32.totalorder %s31, 1
          %s489 = scalar_select %p488, %s31, 1
          %s490 = scalar_lea.vmem %s6, %s489
        $region44: #{tpu_custom_call.1} parent=15 // pred_fallthru
          _
        // Predicated region
        $region45: #{tpu_custom_call.1} parent=15 // pred_check
          %p491 = pneg %p237
        $region46: #{tpu_custom_call.1} parent=15 // pred_check_branch
          %493 = sbr.rel (%p491) target = $region48
        $region47: #{tpu_custom_call.1} parent=15 // pred_region
          %p494 = scmp.lt.s32.totalorder %s31, 1
          %s495 = scalar_select %p494, %s31, 1
          %s496 = scalar_lea.vmem %s7, %s495
        $region48: #{tpu_custom_call.1} parent=15 // pred_fallthru
          _
        // Predicated region
        $region49: #{tpu_custom_call.1} parent=15 // pred_check
          %p497 = pneg %p263
        $region50: #{tpu_custom_call.1} parent=15 // pred_check_branch
          %499 = sbr.rel (%p497) target = $region52
        $region51: #{tpu_custom_call.1} parent=15 // pred_region
          %p500 = scmp.lt.s32.totalorder %s31, 1
          %s501 = scalar_select %p500, %s31, 1
          %s502 = scalar_lea.vmem %s8, %s501
        $region52: #{tpu_custom_call.1} parent=15 // pred_fallthru
          _
        // Predicated region
        $region53: #{tpu_custom_call.1} parent=15 // pred_check
          %p503 = pneg %p289
        $region54: #{tpu_custom_call.1} parent=15 // pred_check_branch
          %505 = sbr.rel (%p503) target = $region56
        $region55: #{tpu_custom_call.1} parent=15 // pred_region
          %p506 = scmp.lt.s32.totalorder %s31, 1
          %s507 = scalar_select %p506, %s31, 1
          %s508 = scalar_lea.vmem %s9, %s507
        $region56: #{tpu_custom_call.1} parent=15 // pred_fallthru
          _
        // Predicated region
        $region57: #{tpu_custom_call.1} parent=15 // pred_check
          %p509 = pneg %p315
        $region58: #{tpu_custom_call.1} parent=15 // pred_check_branch
          %511 = sbr.rel (%p509) target = $region60
        $region59: #{tpu_custom_call.1} parent=15 // pred_region
          %p512 = scmp.lt.s32.totalorder %s31, 1
          %s513 = scalar_select %p512, %s31, 1
          %s514 = smul.addr %s513, 4
          %s515 = smul.addr %s514, 4
          %s516 = scalar_lea.vmem %s10, %s515
        $region60: #{tpu_custom_call.1} parent=15 // pred_fallthru
          _
        // Predicated region
        $region61: #{tpu_custom_call.1} parent=15 // pred_check
          %p517 = pneg %p341
        $region62: #{tpu_custom_call.1} parent=15 // pred_check_branch
          %519 = sbr.rel (%p517) target = $region64
        $region63: #{tpu_custom_call.1} parent=15 // pred_region
          %p520 = scmp.lt.s32.totalorder %s31, 1
          %s521 = scalar_select %p520, %s31, 1
          %s522 = scalar_lea.vmem %s11, %s521
        $region64: #{tpu_custom_call.1} parent=15 // pred_fallthru
          _
        // Predicated region
        $region65: #{tpu_custom_call.1} parent=15 // pred_check
          %p523 = pneg %p367
        $region66: #{tpu_custom_call.1} parent=15 // pred_check_branch
          %525 = sbr.rel (%p523) target = $region68
        $region67: #{tpu_custom_call.1} parent=15 // pred_region
          %p526 = scmp.lt.s32.totalorder %s31, 1
          %s527 = scalar_select %p526, %s31, 1
          %s528 = smul.addr %s527, 16
          %s529 = smul.addr %s528, 4
          %s530 = scalar_lea.vmem %s12, %s529
        $region68: #{tpu_custom_call.1} parent=15 // pred_fallthru
          _
        // Predicated region
        $region69: #{tpu_custom_call.1} parent=15 // pred_check
          %p531 = pneg %p393
        $region70: #{tpu_custom_call.1} parent=15 // pred_check_branch
          %533 = sbr.rel (%p531) target = $region72
        $region71: #{tpu_custom_call.1} parent=15 // pred_region
          %p534 = scmp.lt.s32.totalorder %s31, 1
          %s535 = scalar_select %p534, %s31, 1
          %s536 = scalar_lea.vmem %s13, %s535
        $region72: #{tpu_custom_call.1} parent=15 // pred_fallthru
          _
      $region16: #{tpu_custom_call.1} parent=5 // pred_fallthru
        _
      %p537 = scmp.le.s32.totalorder 1, %s23
      %p538 = scmp.lt.s32.totalorder %s23, 5
      %p539 = pnand %p537, %p538
      %p540 = pneg %p539
      // Predicated region
      $region73: #{tpu_custom_call.1} parent=5 // pred_check
        _
      $region74: #{tpu_custom_call.1} parent=5 // pred_check_branch
        %542 = sbr.rel (%p539) target = $region76
      $region75: #{tpu_custom_call.1} parent=5 // pred_region
        %s543 = ssub.s32 %s23, 1
        %p544 = scmp.lt.s32.totalorder %s32, 1
        %s545 = scalar_select %p544, %s32, 1
        %s546 = smul.addr %s545, 8
        %s547 = scalar_lea.vmem %s0, %s546
        %p548 = pneg %p61
        %p549 = pneg %p58
        %p550 = scmp.lt.s32.totalorder %s32, 1
        %s551 = scalar_select %p550, %s32, 1
        %s552 = scalar_lea.vmem %s1, %s551
        %p553 = pneg %p87
        %p554 = pneg %p84
        %p555 = scmp.lt.s32.totalorder %s33, 1
        %s556 = scalar_select %p555, %s33, 1
        %s557 = smul.addr %s556, 4
        %s558 = smul.addr %s557, 4
        %s559 = scalar_lea.vmem %s2, %s558
        %p560 = pneg %p113
        %p561 = pneg %p110
        %p562 = scmp.lt.s32.totalorder %s33, 1
        %s563 = scalar_select %p562, %s33, 1
        %s564 = scalar_lea.vmem %s3, %s563
        %p565 = pneg %p139
        %p566 = pneg %p136
        %p567 = scmp.lt.s32.totalorder %s33, 1
        %s568 = scalar_select %p567, %s33, 1
        %s569 = smul.addr %s568, 4
        %s570 = smul.addr %s569, 4
        %s571 = scalar_lea.vmem %s4, %s570
        %p572 = pneg %p165
        %p573 = pneg %p162
        %p574 = scmp.lt.s32.totalorder %s33, 1
        %s575 = scalar_select %p574, %s33, 1
        %s576 = scalar_lea.vmem %s5, %s575
        %p577 = pneg %p191
        %p578 = pneg %p188
        %p579 = scmp.lt.s32.totalorder %s33, 1
        %s580 = scalar_select %p579, %s33, 1
        %s581 = scalar_lea.vmem %s6, %s580
        %p582 = pneg %p217
        %p583 = pneg %p214
        %p584 = scmp.lt.s32.totalorder %s33, 1
        %s585 = scalar_select %p584, %s33, 1
        %s586 = scalar_lea.vmem %s7, %s585
        %p587 = pneg %p243
        %p588 = pneg %p240
        %p589 = scmp.lt.s32.totalorder %s33, 1
        %s590 = scalar_select %p589, %s33, 1
        %s591 = scalar_lea.vmem %s8, %s590
        %p592 = pneg %p269
        %p593 = pneg %p266
        %p594 = scmp.lt.s32.totalorder %s33, 1
        %s595 = scalar_select %p594, %s33, 1
        %s596 = scalar_lea.vmem %s9, %s595
        %p597 = pneg %p295
        %p598 = pneg %p292
        %p599 = scmp.lt.s32.totalorder %s33, 1
        %s600 = scalar_select %p599, %s33, 1
        %s601 = smul.addr %s600, 4
        %s602 = smul.addr %s601, 4
        %s603 = scalar_lea.vmem %s10, %s602
        %p604 = pneg %p321
        %p605 = pneg %p318
        %p606 = scmp.lt.s32.totalorder %s33, 1
        %s607 = scalar_select %p606, %s33, 1
        %s608 = scalar_lea.vmem %s11, %s607
        %p609 = pneg %p347
        %p610 = pneg %p344
        %p611 = scmp.lt.s32.totalorder %s33, 1
        %s612 = scalar_select %p611, %s33, 1
        %s613 = smul.addr %s612, 16
        %s614 = smul.addr %s613, 4
        %s615 = scalar_lea.vmem %s12, %s614
        %p616 = pneg %p373
        %p617 = pneg %p370
        %p618 = scmp.lt.s32.totalorder %s33, 1
        %s619 = scalar_select %p618, %s33, 1
        %s620 = scalar_lea.vmem %s13, %s619
        %p621 = pneg %p399
        %p622 = pneg %p396
        %p623 = pneg %p425
        %p624 = pneg %p422
        %s625 = sand.u32 %s412, 1
        %s626 = scalar_lea.sflag [#allocation3], %s625
        %s627 = sand.u32 %s412, 1
        %s628 = smul.addr %s627, 8
        %s629 = scalar_lea.vmem [#allocation2], %s628
        %p630 = scmp.lt.s32.totalorder %s32, 1
        %s631 = scalar_select %p630, %s32, 1
        %s632 = smul.addr %s631, 8
        %s633 = scalar_lea.vmem %s0, %s632
        %p634 = scmp.lt.s32.totalorder %s32, 1
        %s635 = scalar_select %p634, %s32, 1
        %s636 = scalar_lea.vmem %s1, %s635
        %p637 = scmp.lt.s32.totalorder %s33, 1
        %s638 = scalar_select %p637, %s33, 1
        %s639 = smul.addr %s638, 4
        %s640 = smul.addr %s639, 4
        %s641 = scalar_lea.vmem %s2, %s640
        %p642 = scmp.lt.s32.totalorder %s33, 1
        %s643 = scalar_select %p642, %s33, 1
        %s644 = scalar_lea.vmem %s3, %s643
        %p645 = scmp.lt.s32.totalorder %s33, 1
        %s646 = scalar_select %p645, %s33, 1
        %s647 = smul.addr %s646, 4
        %s648 = smul.addr %s647, 4
        %s649 = scalar_lea.vmem %s4, %s648
        %p650 = scmp.lt.s32.totalorder %s33, 1
        %s651 = scalar_select %p650, %s33, 1
        %s652 = scalar_lea.vmem %s5, %s651
        %p653 = scmp.lt.s32.totalorder %s33, 1
        %s654 = scalar_select %p653, %s33, 1
        %s655 = scalar_lea.vmem %s6, %s654
        %p656 = scmp.lt.s32.totalorder %s33, 1
        %s657 = scalar_select %p656, %s33, 1
        %s658 = scalar_lea.vmem %s7, %s657
        %p659 = scmp.lt.s32.totalorder %s33, 1
        %s660 = scalar_select %p659, %s33, 1
        %s661 = scalar_lea.vmem %s8, %s660
        %p662 = scmp.lt.s32.totalorder %s33, 1
        %s663 = scalar_select %p662, %s33, 1
        %s664 = scalar_lea.vmem %s9, %s663
        %p665 = scmp.lt.s32.totalorder %s33, 1
        %s666 = scalar_select %p665, %s33, 1
        %s667 = smul.addr %s666, 4
        %s668 = smul.addr %s667, 4
        %s669 = scalar_lea.vmem %s10, %s668
        %p670 = scmp.lt.s32.totalorder %s33, 1
        %s671 = scalar_select %p670, %s33, 1
        %s672 = scalar_lea.vmem %s11, %s671
        %p673 = scmp.lt.s32.totalorder %s33, 1
        %s674 = scalar_select %p673, %s33, 1
        %s675 = smul.addr %s674, 16
        %s676 = smul.addr %s675, 4
        %s677 = scalar_lea.vmem %s12, %s676
        %p678 = scmp.lt.s32.totalorder %s33, 1
        %s679 = scalar_select %p678, %s33, 1
        %s680 = scalar_lea.vmem %s13, %s679
        %p682 = scmp.eq.s32.totalorder %s33, 0
        // Predicated region
        $region77: #{tpu_custom_call.1} parent=75 // pred_check
          %p683 = pneg %p682
        $region78: #{tpu_custom_call.1} parent=75 // pred_check_branch
          %685 = sbr.rel (%p683) target = $region80
        $region79: #{tpu_custom_call.1} parent=75 // pred_region
          %v686 = vld [vmem:[%s633] sm:$0xff]
          %vm687 = vcmask 261120
          %688 = vst.msk [vmem:[%s629] sm:$0xff] %vm687, %v686
        $region80: #{tpu_custom_call.1} parent=75 // pred_fallthru
          _
        %v689 = vld [vmem:[%s629] sm:$0xff]
        %v690 = vpack.c.bf16 %v689, %v689
        %v691 = vld [vmem:[%s641] sm:$0xf]
        %v692 = vld [vmem:[%s641 + $0x4] sm:$0xf]
        %v693 = vld [vmem:[%s641 + $0x8] sm:$0xf]
        %v694 = vld [vmem:[%s641 + $0xc] sm:$0xf]
        %v695 = vld [vmem:[%s644] sm:$0x1]
        %v697 = vlaneseq
        %v698 = vshrl.u32 %v697, 7
        %v699 = vsub.s32 0, %v698
        %v700 = vrot.slane %v695, %v699
        %v706 = vunpack.c.l.b16 %v691
        %v707 = vunpack.c.l.b16 %v692
        %v708 = vunpack.c.l.b16 %v693
        %v709 = vunpack.c.l.b16 %v694
        %v710 = vpack.c.b16 %v707, %v706
        %v711 = vpack.c.b16 %v709, %v708
        %vm714 = vcmask 261120
        %v716 = vsel %vm714, %v690, 0
        %718 = vmatprep.subr.bf16.mxu0 0
        %719 = vmatpush1.bf16.msra.mxu0 %v710
        %720 = vmatprep.subr.bf16.mxu0 0
        %721 = vmatpush1.bf16.msra.mxu0 %v711
        %722 = vmatprep.subr.bf16.mxu0 0
        %723 = vmatpush1.bf16.msra.mxu0 0
        %724 = vmatprep.subr.bf16.mxu0 0
        %725 = vmatpush1.bf16.msra.mxu0 0
        %726 = vmatprep.subr.bf16.mxu0 0
        %727 = vmatpush1.bf16.msra.mxu0 0
        %728 = vmatprep.subr.bf16.mxu0 0
        %729 = vmatpush1.bf16.msra.mxu0 0
        %730 = vmatprep.subr.bf16.mxu0 0
        %731 = vmatpush1.bf16.msra.mxu0 0
        %732 = vmatprep.subr.bf16.mxu0 0
        %733 = vmatpush1.bf16.msra.mxu0 0
        %734 = vmatprep.subr.bf16.mxu0 0
        %735 = vmatpush1.bf16.msra.mxu0 0
        %736 = vmatprep.subr.bf16.mxu0 0
        %737 = vmatpush1.bf16.msra.mxu0 0
        %738 = vmatprep.subr.bf16.mxu0 0
        %739 = vmatpush1.bf16.msra.mxu0 0
        %740 = vmatprep.subr.bf16.mxu0 0
        %741 = vmatpush1.bf16.msra.mxu0 0
        %742 = vmatprep.subr.bf16.mxu0 0
        %743 = vmatpush1.bf16.msra.mxu0 0
        %744 = vmatprep.subr.bf16.mxu0 0
        %745 = vmatpush1.bf16.msra.mxu0 0
        %746 = vmatprep.subr.bf16.mxu0 0
        %747 = vmatpush1.bf16.msra.mxu0 0
        %748 = vmatprep.subr.bf16.mxu0 0
        %749 = vmatpush1.bf16.msra.mxu0 0
        %750 = vmatprep.mubr.bf16.mxu0 0
        %751 = vmatmul.mubr.bf16.gmra.mrb[0].mxu0 %v716
        %v752 = vpop.f32.mrb[0].mxu0
        %v753 = vadd.f32 %v700, %v752
        %v754 = vpop.f32.mrb[0].mxu0
        %v755 = vpop.f32.mrb[0].mxu0
        %v756 = vpop.f32.mrb[0].mxu0
        %757 = vdwg.mxu0
        %v758 = vld [vmem:[%s636] sm:$0x1]
        %v759 = vpack.c.bf16 %v753, %v753
        %v761 = vlaneseq
        %v762 = vshrl.u32 %v761, 7
        %v763 = vsub.s32 0, %v762
        %v764 = vrot.slane %v758, %v763
        %767 = vrot.lane.b32.xlu0 %v759, 96
        %v768 = vpop.permute.xlu0 %767
        %vm769 = vcmask 64512
        %v771 = vsel %vm769, %v759, 0
        %v774 = vsel %vm769, %v768, 0
        %776 = vmatprep.subr.bf16.mxu0 0
        %777 = vmatpush1.bf16.xpose.msra.mxu0 %v774
        %778 = vmatprep.subr.bf16.mxu0 0
        %779 = vmatpush1.bf16.xpose.msra.mxu0 0
        %780 = vmatprep.subr.bf16.mxu0 0
        %781 = vmatpush1.bf16.xpose.msra.mxu0 0
        %782 = vmatprep.subr.bf16.mxu0 0
        %783 = vmatpush1.bf16.xpose.msra.mxu0 0
        %784 = vmatprep.subr.bf16.mxu0 0
        %785 = vmatpush1.bf16.xpose.msra.mxu0 0
        %786 = vmatprep.subr.bf16.mxu0 0
        %787 = vmatpush1.bf16.xpose.msra.mxu0 0
        %788 = vmatprep.subr.bf16.mxu0 0
        %789 = vmatpush1.bf16.xpose.msra.mxu0 0
        %790 = vmatprep.subr.bf16.mxu0 0
        %791 = vmatpush1.bf16.xpose.msra.mxu0 0
        %792 = vmatprep.subr.bf16.mxu0 0
        %793 = vmatpush1.bf16.xpose.msra.mxu0 0
        %794 = vmatprep.subr.bf16.mxu0 0
        %795 = vmatpush1.bf16.xpose.msra.mxu0 0
        %796 = vmatprep.subr.bf16.mxu0 0
        %797 = vmatpush1.bf16.xpose.msra.mxu0 0
        %798 = vmatprep.subr.bf16.mxu0 0
        %799 = vmatpush1.bf16.xpose.msra.mxu0 0
        %800 = vmatprep.subr.bf16.mxu0 0
        %801 = vmatpush1.bf16.xpose.msra.mxu0 0
        %802 = vmatprep.subr.bf16.mxu0 0
        %803 = vmatpush1.bf16.xpose.msra.mxu0 0
        %804 = vmatprep.subr.bf16.mxu0 0
        %805 = vmatpush1.bf16.xpose.msra.mxu0 0
        %806 = vmatprep.subr.bf16.mxu0 0
        %807 = vmatpush1.bf16.xpose.msra.mxu0 0
        %808 = vmatprep.mubr.bf16.mxu0 0
        %809 = vmatmul.mubr.bf16.gmra.mrb[0].mxu0 %v771
        %v810 = vpop.f32.mrb[0].mxu0
        %v811 = vadd.f32 %v764, %v810
        %v812 = vpop.f32.mrb[0].mxu0
        %v813 = vpop.f32.mrb[0].mxu0
        %v814 = vpop.f32.mrb[0].mxu0
        %815 = vdwg.mxu0
        %v816 = vsel %vm769, %v811, -inf
        %817 = vmax.xlane.f32.xlu0 %v816
        %v818 = vpop.xlane.xlu0 %817
        %v819 = vsub.f32 %v811, %v818
        %v820 = vmul.f32 %v819, 1.442695
        %v821 = vpow.pop %v820
        %v822 = vsel %vm769, %v821, 0.0
        %823 = vadd.xlane.f32.xlu0 %v822
        %v824 = vpop.xlane.xlu0 %823
        %v825 = vrcp.pop %v824
        %v826 = vmul.f32 %v821, %v825
        %v827 = vpack.c.bf16 %v826, %v826
        %828 = vrot.lane.b32.xlu0 %v759, 64
        %v829 = vpop.permute.xlu0 %828
        %v831 = vsel %vm769, %v827, 0
        %vm833 = vcmask 1043456
        %v835 = vsel %vm833, %v829, 0
        %837 = vmatprep.subr.bf16.mxu0 0
        %838 = vmatpush1.bf16.msra.mxu0 %v835
        %839 = vmatprep.subr.bf16.mxu0 0
        %840 = vmatpush1.bf16.msra.mxu0 0
        %841 = vmatprep.subr.bf16.mxu0 0
        %842 = vmatpush1.bf16.msra.mxu0 0
        %843 = vmatprep.subr.bf16.mxu0 0
        %844 = vmatpush1.bf16.msra.mxu0 0
        %845 = vmatprep.subr.bf16.mxu0 0
        %846 = vmatpush1.bf16.msra.mxu0 0
        %847 = vmatprep.subr.bf16.mxu0 0
        %848 = vmatpush1.bf16.msra.mxu0 0
        %849 = vmatprep.subr.bf16.mxu0 0
        %850 = vmatpush1.bf16.msra.mxu0 0
        %851 = vmatprep.subr.bf16.mxu0 0
        %852 = vmatpush1.bf16.msra.mxu0 0
        %853 = vmatprep.subr.bf16.mxu0 0
        %854 = vmatpush1.bf16.msra.mxu0 0
        %855 = vmatprep.subr.bf16.mxu0 0
        %856 = vmatpush1.bf16.msra.mxu0 0
        %857 = vmatprep.subr.bf16.mxu0 0
        %858 = vmatpush1.bf16.msra.mxu0 0
        %859 = vmatprep.subr.bf16.mxu0 0
        %860 = vmatpush1.bf16.msra.mxu0 0
        %861 = vmatprep.subr.bf16.mxu0 0
        %862 = vmatpush1.bf16.msra.mxu0 0
        %863 = vmatprep.subr.bf16.mxu0 0
        %864 = vmatpush1.bf16.msra.mxu0 0
        %865 = vmatprep.subr.bf16.mxu0 0
        %866 = vmatpush1.bf16.msra.mxu0 0
        %867 = vmatprep.subr.bf16.mxu0 0
        %868 = vmatpush1.bf16.msra.mxu0 0
        %869 = vmatprep.mubr.bf16.mxu0 0
        %870 = vmatmul.mubr.bf16.gmra.mrb[0].mxu0 %v831
        %v871 = vpop.f32.mrb[0].mxu0
        %v872 = vadd.f32 0.0, %v871
        %v873 = vpop.f32.mrb[0].mxu0
        %v874 = vpop.f32.mrb[0].mxu0
        %v875 = vpop.f32.mrb[0].mxu0
        %876 = vdwg.mxu0
        %v877 = vpack.c.bf16 %v872, %v872
        %v878 = vld [vmem:[%s649] sm:$0xf]
        %879 = vrot.lane.b32.xlu0 %v759, 120
        %v880 = vpop.permute.xlu0 %879
        %881 = vrot.lane.b32.xlu0 %v759, 88
        %v882 = vpop.permute.xlu0 %881
        %v884 = vsel %vm769, %v880, 0
        %v887 = vsel %vm769, %v882, 0
        %889 = vmatprep.subr.bf16.mxu0 0
        %890 = vmatpush1.bf16.xpose.msra.mxu0 %v887
        %891 = vmatprep.subr.bf16.mxu0 0
        %892 = vmatpush1.bf16.xpose.msra.mxu0 0
        %893 = vmatprep.subr.bf16.mxu0 0
        %894 = vmatpush1.bf16.xpose.msra.mxu0 0
        %895 = vmatprep.subr.bf16.mxu0 0
        %896 = vmatpush1.bf16.xpose.msra.mxu0 0
        %897 = vmatprep.subr.bf16.mxu0 0
        %898 = vmatpush1.bf16.xpose.msra.mxu0 0
        %899 = vmatprep.subr.bf16.mxu0 0
        %900 = vmatpush1.bf16.xpose.msra.mxu0 0
        %901 = vmatprep.subr.bf16.mxu0 0
        %902 = vmatpush1.bf16.xpose.msra.mxu0 0
        %903 = vmatprep.subr.bf16.mxu0 0
        %904 = vmatpush1.bf16.xpose.msra.mxu0 0
        %905 = vmatprep.subr.bf16.mxu0 0
        %906 = vmatpush1.bf16.xpose.msra.mxu0 0
        %907 = vmatprep.subr.bf16.mxu0 0
        %908 = vmatpush1.bf16.xpose.msra.mxu0 0
        %909 = vmatprep.subr.bf16.mxu0 0
        %910 = vmatpush1.bf16.xpose.msra.mxu0 0
        %911 = vmatprep.subr.bf16.mxu0 0
        %912 = vmatpush1.bf16.xpose.msra.mxu0 0
        %913 = vmatprep.subr.bf16.mxu0 0
        %914 = vmatpush1.bf16.xpose.msra.mxu0 0
        %915 = vmatprep.subr.bf16.mxu0 0
        %916 = vmatpush1.bf16.xpose.msra.mxu0 0
        %917 = vmatprep.subr.bf16.mxu0 0
        %918 = vmatpush1.bf16.xpose.msra.mxu0 0
        %919 = vmatprep.subr.bf16.mxu0 0
        %920 = vmatpush1.bf16.xpose.msra.mxu0 0
        %921 = vmatprep.mubr.bf16.mxu0 0
        %922 = vmatmul.mubr.bf16.gmra.mrb[0].mxu0 %v884
        %v923 = vpop.f32.mrb[0].mxu0
        %v924 = vadd.f32 %v764, %v923
        %v925 = vpop.f32.mrb[0].mxu0
        %v926 = vpop.f32.mrb[0].mxu0
        %v927 = vpop.f32.mrb[0].mxu0
        %928 = vdwg.mxu0
        %v929 = vsel %vm769, %v924, -inf
        %930 = vmax.xlane.f32.xlu0 %v929
        %v931 = vpop.xlane.xlu0 %930
        %v932 = vsub.f32 %v924, %v931
        %v933 = vmul.f32 %v932, 1.442695
        %v934 = vpow.pop %v933
        %v935 = vsel %vm769, %v934, 0.0
        %936 = vadd.xlane.f32.xlu0 %v935
        %v937 = vpop.xlane.xlu0 %936
        %v938 = vrcp.pop %v937
        %v939 = vmul.f32 %v934, %v938
        %v940 = vpack.c.bf16 %v939, %v939
        %941 = vrot.lane.b32.xlu0 %v759, 56
        %v942 = vpop.permute.xlu0 %941
        %v944 = vsel %vm769, %v940, 0
        %v947 = vsel %vm833, %v942, 0
        %949 = vmatprep.subr.bf16.mxu0 0
        %950 = vmatpush1.bf16.msra.mxu0 %v947
        %951 = vmatprep.subr.bf16.mxu0 0
        %952 = vmatpush1.bf16.msra.mxu0 0
        %953 = vmatprep.subr.bf16.mxu0 0
        %954 = vmatpush1.bf16.msra.mxu0 0
        %955 = vmatprep.subr.bf16.mxu0 0
        %956 = vmatpush1.bf16.msra.mxu0 0
        %957 = vmatprep.subr.bf16.mxu0 0
        %958 = vmatpush1.bf16.msra.mxu0 0
        %959 = vmatprep.subr.bf16.mxu0 0
        %960 = vmatpush1.bf16.msra.mxu0 0
        %961 = vmatprep.subr.bf16.mxu0 0
        %962 = vmatpush1.bf16.msra.mxu0 0
        %963 = vmatprep.subr.bf16.mxu0 0
        %964 = vmatpush1.bf16.msra.mxu0 0
        %965 = vmatprep.subr.bf16.mxu0 0
        %966 = vmatpush1.bf16.msra.mxu0 0
        %967 = vmatprep.subr.bf16.mxu0 0
        %968 = vmatpush1.bf16.msra.mxu0 0
        %969 = vmatprep.subr.bf16.mxu0 0
        %970 = vmatpush1.bf16.msra.mxu0 0
        %971 = vmatprep.subr.bf16.mxu0 0
        %972 = vmatpush1.bf16.msra.mxu0 0
        %973 = vmatprep.subr.bf16.mxu0 0
        %974 = vmatpush1.bf16.msra.mxu0 0
        %975 = vmatprep.subr.bf16.mxu0 0
        %976 = vmatpush1.bf16.msra.mxu0 0
        %977 = vmatprep.subr.bf16.mxu0 0
        %978 = vmatpush1.bf16.msra.mxu0 0
        %979 = vmatprep.subr.bf16.mxu0 0
        %980 = vmatpush1.bf16.msra.mxu0 0
        %981 = vmatprep.mubr.bf16.mxu0 0
        %982 = vmatmul.mubr.bf16.gmra.mrb[0].mxu0 %v944
        %v983 = vpop.f32.mrb[0].mxu0
        %v984 = vadd.f32 0.0, %v983
        %v985 = vpop.f32.mrb[0].mxu0
        %v986 = vpop.f32.mrb[0].mxu0
        %v987 = vpop.f32.mrb[0].mxu0
        %988 = vdwg.mxu0
        %v989 = vpack.c.bf16 %v984, %v984
        %s990 = scalar_lea.vmem %s649, 4
        %v991 = vld [vmem:[%s990] sm:$0xf]
        %v993 = vsel %vm769, %v989, 0
        %v996 = vsel %vm833, %v991, 0
        %998 = vmatprep.subr.bf16.mxu0 0
        %999 = vmatpush1.bf16.msra.mxu0 %v996
        %1000 = vmatprep.subr.bf16.mxu0 0
        %1001 = vmatpush1.bf16.msra.mxu0 0
        %1002 = vmatprep.subr.bf16.mxu0 0
        %1003 = vmatpush1.bf16.msra.mxu0 0
        %1004 = vmatprep.subr.bf16.mxu0 0
        %1005 = vmatpush1.bf16.msra.mxu0 0
        %1006 = vmatprep.subr.bf16.mxu0 0
        %1007 = vmatpush1.bf16.msra.mxu0 0
        %1008 = vmatprep.subr.bf16.mxu0 0
        %1009 = vmatpush1.bf16.msra.mxu0 0
        %1010 = vmatprep.subr.bf16.mxu0 0
        %1011 = vmatpush1.bf16.msra.mxu0 0
        %1012 = vmatprep.subr.bf16.mxu0 0
        %1013 = vmatpush1.bf16.msra.mxu0 0
        %1014 = vmatprep.subr.bf16.mxu0 0
        %1015 = vmatpush1.bf16.msra.mxu0 0
        %1016 = vmatprep.subr.bf16.mxu0 0
        %1017 = vmatpush1.bf16.msra.mxu0 0
        %1018 = vmatprep.subr.bf16.mxu0 0
        %1019 = vmatpush1.bf16.msra.mxu0 0
        %1020 = vmatprep.subr.bf16.mxu0 0
        %1021 = vmatpush1.bf16.msra.mxu0 0
        %1022 = vmatprep.subr.bf16.mxu0 0
        %1023 = vmatpush1.bf16.msra.mxu0 0
        %1024 = vmatprep.subr.bf16.mxu0 0
        %1025 = vmatpush1.bf16.msra.mxu0 0
        %1026 = vmatprep.subr.bf16.mxu0 0
        %1027 = vmatpush1.bf16.msra.mxu0 0
        %1028 = vmatprep.subr.bf16.mxu0 0
        %1029 = vmatpush1.bf16.msra.mxu0 0
        %1030 = vmatprep.mubr.bf16.mxu0 0
        %1031 = vmatmul.mubr.bf16.gmra.mrb[0].mxu0 %v993
        %v1032 = vpop.f32.mrb[0].mxu0
        %v1033 = vadd.f32 0.0, %v1032
        %v1034 = vpop.f32.mrb[0].mxu0
        %v1035 = vpop.f32.mrb[0].mxu0
        %v1036 = vpop.f32.mrb[0].mxu0
        %1037 = vdwg.mxu0
        %v1039 = vsel %vm769, %v877, 0
        %v1042 = vsel %vm833, %v878, 0
        %1044 = vmatprep.subr.bf16.mxu0 0
        %1045 = vmatpush1.bf16.msra.mxu0 %v1042
        %1046 = vmatprep.subr.bf16.mxu0 0
        %1047 = vmatpush1.bf16.msra.mxu0 0
        %1048 = vmatprep.subr.bf16.mxu0 0
        %1049 = vmatpush1.bf16.msra.mxu0 0
        %1050 = vmatprep.subr.bf16.mxu0 0
        %1051 = vmatpush1.bf16.msra.mxu0 0
        %1052 = vmatprep.subr.bf16.mxu0 0
        %1053 = vmatpush1.bf16.msra.mxu0 0
        %1054 = vmatprep.subr.bf16.mxu0 0
        %1055 = vmatpush1.bf16.msra.mxu0 0
        %1056 = vmatprep.subr.bf16.mxu0 0
        %1057 = vmatpush1.bf16.msra.mxu0 0
        %1058 = vmatprep.subr.bf16.mxu0 0
        %1059 = vmatpush1.bf16.msra.mxu0 0
        %1060 = vmatprep.subr.bf16.mxu0 0
        %1061 = vmatpush1.bf16.msra.mxu0 0
        %1062 = vmatprep.subr.bf16.mxu0 0
        %1063 = vmatpush1.bf16.msra.mxu0 0
        %1064 = vmatprep.subr.bf16.mxu0 0
        %1065 = vmatpush1.bf16.msra.mxu0 0
        %1066 = vmatprep.subr.bf16.mxu0 0
        %1067 = vmatpush1.bf16.msra.mxu0 0
        %1068 = vmatprep.subr.bf16.mxu0 0
        %1069 = vmatpush1.bf16.msra.mxu0 0
        %1070 = vmatprep.subr.bf16.mxu0 0
        %1071 = vmatpush1.bf16.msra.mxu0 0
        %1072 = vmatprep.subr.bf16.mxu0 0
        %1073 = vmatpush1.bf16.msra.mxu0 0
        %1074 = vmatprep.subr.bf16.mxu0 0
        %1075 = vmatpush1.bf16.msra.mxu0 0
        %1076 = vmatprep.mubr.bf16.mxu0 0
        %1077 = vmatmul.mubr.bf16.gmra.mrb[0].mxu0 %v1039
        %v1078 = vpop.f32.mrb[0].mxu0
        %v1079 = vadd.f32 %v1033, %v1078
        %v1080 = vpop.f32.mrb[0].mxu0
        %v1081 = vpop.f32.mrb[0].mxu0
        %v1082 = vpop.f32.mrb[0].mxu0
        %1083 = vdwg.mxu0
        %1084 = vrot.lane.b32.xlu0 %v759, 112
        %v1085 = vpop.permute.xlu0 %1084
        %1086 = vrot.lane.b32.xlu0 %v759, 80
        %v1087 = vpop.permute.xlu0 %1086
        %v1089 = vsel %vm769, %v1085, 0
        %v1092 = vsel %vm769, %v1087, 0
        %1094 = vmatprep.subr.bf16.mxu0 0
        %1095 = vmatpush1.bf16.xpose.msra.mxu0 %v1092
        %1096 = vmatprep.subr.bf16.mxu0 0
        %1097 = vmatpush1.bf16.xpose.msra.mxu0 0
        %1098 = vmatprep.subr.bf16.mxu0 0
        %1099 = vmatpush1.bf16.xpose.msra.mxu0 0
        %1100 = vmatprep.subr.bf16.mxu0 0
        %1101 = vmatpush1.bf16.xpose.msra.mxu0 0
        %1102 = vmatprep.subr.bf16.mxu0 0
        %1103 = vmatpush1.bf16.xpose.msra.mxu0 0
        %1104 = vmatprep.subr.bf16.mxu0 0
        %1105 = vmatpush1.bf16.xpose.msra.mxu0 0
        %1106 = vmatprep.subr.bf16.mxu0 0
        %1107 = vmatpush1.bf16.xpose.msra.mxu0 0
        %1108 = vmatprep.subr.bf16.mxu0 0
        %1109 = vmatpush1.bf16.xpose.msra.mxu0 0
        %1110 = vmatprep.subr.bf16.mxu0 0
        %1111 = vmatpush1.bf16.xpose.msra.mxu0 0
        %1112 = vmatprep.subr.bf16.mxu0 0
        %1113 = vmatpush1.bf16.xpose.msra.mxu0 0
        %1114 = vmatprep.subr.bf16.mxu0 0
        %1115 = vmatpush1.bf16.xpose.msra.mxu0 0
        %1116 = vmatprep.subr.bf16.mxu0 0
        %1117 = vmatpush1.bf16.xpose.msra.mxu0 0
        %1118 = vmatprep.subr.bf16.mxu0 0
        %1119 = vmatpush1.bf16.xpose.msra.mxu0 0
        %1120 = vmatprep.subr.bf16.mxu0 0
        %1121 = vmatpush1.bf16.xpose.msra.mxu0 0
        %1122 = vmatprep.subr.bf16.mxu0 0
        %1123 = vmatpush1.bf16.xpose.msra.mxu0 0
        %1124 = vmatprep.subr.bf16.mxu0 0
        %1125 = vmatpush1.bf16.xpose.msra.mxu0 0
        %1126 = vmatprep.mubr.bf16.mxu0 0
        %1127 = vmatmul.mubr.bf16.gmra.mrb[0].mxu0 %v1089
        %v1128 = vpop.f32.mrb[0].mxu0
        %v1129 = vadd.f32 %v764, %v1128
        %v1130 = vpop.f32.mrb[0].mxu0
        %v1131 = vpop.f32.mrb[0].mxu0
        %v1132 = vpop.f32.mrb[0].mxu0
        %1133 = vdwg.mxu0
        %v1134 = vsel %vm769, %v1129, -inf
        %1135 = vmax.xlane.f32.xlu0 %v1134
        %v1136 = vpop.xlane.xlu0 %1135
        %v1137 = vsub.f32 %v1129, %v1136
        %v1138 = vmul.f32 %v1137, 1.442695
        %v1139 = vpow.pop %v1138
        %v1140 = vsel %vm769, %v1139, 0.0
        %1141 = vadd.xlane.f32.xlu0 %v1140
        %v1142 = vpop.xlane.xlu0 %1141
        %v1143 = vrcp.pop %v1142
        %v1144 = vmul.f32 %v1139, %v1143
        %v1145 = vpack.c.bf16 %v1144, %v1144
        %1146 = vrot.lane.b32.xlu0 %v759, 48
        %v1147 = vpop.permute.xlu0 %1146
        %v1149 = vsel %vm769, %v1145, 0
        %v1152 = vsel %vm833, %v1147, 0
        %1154 = vmatprep.subr.bf16.mxu0 0
        %1155 = vmatpush1.bf16.msra.mxu0 %v1152
        %1156 = vmatprep.subr.bf16.mxu0 0
        %1157 = vmatpush1.bf16.msra.mxu0 0
        %1158 = vmatprep.subr.bf16.mxu0 0
        %1159 = vmatpush1.bf16.msra.mxu0 0
        %1160 = vmatprep.subr.bf16.mxu0 0
        %1161 = vmatpush1.bf16.msra.mxu0 0
        %1162 = vmatprep.subr.bf16.mxu0 0
        %1163 = vmatpush1.bf16.msra.mxu0 0
        %1164 = vmatprep.subr.bf16.mxu0 0
        %1165 = vmatpush1.bf16.msra.mxu0 0
        %1166 = vmatprep.subr.bf16.mxu0 0
        %1167 = vmatpush1.bf16.msra.mxu0 0
        %1168 = vmatprep.subr.bf16.mxu0 0
        %1169 = vmatpush1.bf16.msra.mxu0 0
        %1170 = vmatprep.subr.bf16.mxu0 0
        %1171 = vmatpush1.bf16.msra.mxu0 0
        %1172 = vmatprep.subr.bf16.mxu0 0
        %1173 = vmatpush1.bf16.msra.mxu0 0
        %1174 = vmatprep.subr.bf16.mxu0 0
        %1175 = vmatpush1.bf16.msra.mxu0 0
        %1176 = vmatprep.subr.bf16.mxu0 0
        %1177 = vmatpush1.bf16.msra.mxu0 0
        %1178 = vmatprep.subr.bf16.mxu0 0
        %1179 = vmatpush1.bf16.msra.mxu0 0
        %1180 = vmatprep.subr.bf16.mxu0 0
        %1181 = vmatpush1.bf16.msra.mxu0 0
        %1182 = vmatprep.subr.bf16.mxu0 0
        %1183 = vmatpush1.bf16.msra.mxu0 0
        %1184 = vmatprep.subr.bf16.mxu0 0
        %1185 = vmatpush1.bf16.msra.mxu0 0
        %1186 = vmatprep.mubr.bf16.mxu0 0
        %1187 = vmatmul.mubr.bf16.gmra.mrb[0].mxu0 %v1149
        %v1188 = vpop.f32.mrb[0].mxu0
        %v1189 = vadd.f32 0.0, %v1188
        %v1190 = vpop.f32.mrb[0].mxu0
        %v1191 = vpop.f32.mrb[0].mxu0
        %v1192 = vpop.f32.mrb[0].mxu0
        %1193 = vdwg.mxu0
        %v1194 = vpack.c.bf16 %v1189, %v1189
        %s1195 = scalar_lea.vmem %s649, 8
        %v1196 = vld [vmem:[%s1195] sm:$0xf]
        %v1198 = vsel %vm769, %v1194, 0
        %v1201 = vsel %vm833, %v1196, 0
        %1203 = vmatprep.subr.bf16.mxu0 0
        %1204 = vmatpush1.bf16.msra.mxu0 %v1201
        %1205 = vmatprep.subr.bf16.mxu0 0
        %1206 = vmatpush1.bf16.msra.mxu0 0
        %1207 = vmatprep.subr.bf16.mxu0 0
        %1208 = vmatpush1.bf16.msra.mxu0 0
        %1209 = vmatprep.subr.bf16.mxu0 0
        %1210 = vmatpush1.bf16.msra.mxu0 0
        %1211 = vmatprep.subr.bf16.mxu0 0
        %1212 = vmatpush1.bf16.msra.mxu0 0
        %1213 = vmatprep.subr.bf16.mxu0 0
        %1214 = vmatpush1.bf16.msra.mxu0 0
        %1215 = vmatprep.subr.bf16.mxu0 0
        %1216 = vmatpush1.bf16.msra.mxu0 0
        %1217 = vmatprep.subr.bf16.mxu0 0
        %1218 = vmatpush1.bf16.msra.mxu0 0
        %1219 = vmatprep.subr.bf16.mxu0 0
        %1220 = vmatpush1.bf16.msra.mxu0 0
        %1221 = vmatprep.subr.bf16.mxu0 0
        %1222 = vmatpush1.bf16.msra.mxu0 0
        %1223 = vmatprep.subr.bf16.mxu0 0
        %1224 = vmatpush1.bf16.msra.mxu0 0
        %1225 = vmatprep.subr.bf16.mxu0 0
        %1226 = vmatpush1.bf16.msra.mxu0 0
        %1227 = vmatprep.subr.bf16.mxu0 0
        %1228 = vmatpush1.bf16.msra.mxu0 0
        %1229 = vmatprep.subr.bf16.mxu0 0
        %1230 = vmatpush1.bf16.msra.mxu0 0
        %1231 = vmatprep.subr.bf16.mxu0 0
        %1232 = vmatpush1.bf16.msra.mxu0 0
        %1233 = vmatprep.subr.bf16.mxu0 0
        %1234 = vmatpush1.bf16.msra.mxu0 0
        %1235 = vmatprep.mubr.bf16.mxu0 0
        %1236 = vmatmul.mubr.bf16.gmra.mrb[0].mxu0 %v1198
        %v1237 = vpop.f32.mrb[0].mxu0
        %v1238 = vadd.f32 0.0, %v1237
        %v1239 = vpop.f32.mrb[0].mxu0
        %v1240 = vpop.f32.mrb[0].mxu0
        %v1241 = vpop.f32.mrb[0].mxu0
        %1242 = vdwg.mxu0
        %v1243 = vadd.f32 %v1079, %v1238
        %1244 = vrot.lane.b32.xlu0 %v759, 104
        %v1245 = vpop.permute.xlu0 %1244
        %1246 = vrot.lane.b32.xlu0 %v759, 72
        %v1247 = vpop.permute.xlu0 %1246
        %v1249 = vsel %vm769, %v1245, 0
        %v1252 = vsel %vm769, %v1247, 0
        %1254 = vmatprep.subr.bf16.mxu0 0
        %1255 = vmatpush1.bf16.xpose.msra.mxu0 %v1252
        %1256 = vmatprep.subr.bf16.mxu0 0
        %1257 = vmatpush1.bf16.xpose.msra.mxu0 0
        %1258 = vmatprep.subr.bf16.mxu0 0
        %1259 = vmatpush1.bf16.xpose.msra.mxu0 0
        %1260 = vmatprep.subr.bf16.mxu0 0
        %1261 = vmatpush1.bf16.xpose.msra.mxu0 0
        %1262 = vmatprep.subr.bf16.mxu0 0
        %1263 = vmatpush1.bf16.xpose.msra.mxu0 0
        %1264 = vmatprep.subr.bf16.mxu0 0
        %1265 = vmatpush1.bf16.xpose.msra.mxu0 0
        %1266 = vmatprep.subr.bf16.mxu0 0
        %1267 = vmatpush1.bf16.xpose.msra.mxu0 0
        %1268 = vmatprep.subr.bf16.mxu0 0
        %1269 = vmatpush1.bf16.xpose.msra.mxu0 0
        %1270 = vmatprep.subr.bf16.mxu0 0
        %1271 = vmatpush1.bf16.xpose.msra.mxu0 0
        %1272 = vmatprep.subr.bf16.mxu0 0
        %1273 = vmatpush1.bf16.xpose.msra.mxu0 0
        %1274 = vmatprep.subr.bf16.mxu0 0
        %1275 = vmatpush1.bf16.xpose.msra.mxu0 0
        %1276 = vmatprep.subr.bf16.mxu0 0
        %1277 = vmatpush1.bf16.xpose.msra.mxu0 0
        %1278 = vmatprep.subr.bf16.mxu0 0
        %1279 = vmatpush1.bf16.xpose.msra.mxu0 0
        %1280 = vmatprep.subr.bf16.mxu0 0
        %1281 = vmatpush1.bf16.xpose.msra.mxu0 0
        %1282 = vmatprep.subr.bf16.mxu0 0
        %1283 = vmatpush1.bf16.xpose.msra.mxu0 0
        %1284 = vmatprep.subr.bf16.mxu0 0
        %1285 = vmatpush1.bf16.xpose.msra.mxu0 0
        %1286 = vmatprep.mubr.bf16.mxu0 0
        %1287 = vmatmul.mubr.bf16.gmra.mrb[0].mxu0 %v1249
        %v1288 = vpop.f32.mrb[0].mxu0
        %v1289 = vadd.f32 %v764, %v1288
        %v1290 = vpop.f32.mrb[0].mxu0
        %v1291 = vpop.f32.mrb[0].mxu0
        %v1292 = vpop.f32.mrb[0].mxu0
        %1293 = vdwg.mxu0
        %v1294 = vsel %vm769, %v1289, -inf
        %1295 = vmax.xlane.f32.xlu0 %v1294
        %v1296 = vpop.xlane.xlu0 %1295
        %v1297 = vsub.f32 %v1289, %v1296
        %v1298 = vmul.f32 %v1297, 1.442695
        %v1299 = vpow.pop %v1298
        %v1300 = vsel %vm769, %v1299, 0.0
        %1301 = vadd.xlane.f32.xlu0 %v1300
        %v1302 = vpop.xlane.xlu0 %1301
        %v1303 = vrcp.pop %v1302
        %v1304 = vmul.f32 %v1299, %v1303
        %v1305 = vpack.c.bf16 %v1304, %v1304
        %1306 = vrot.lane.b32.xlu0 %v759, 40
        %v1307 = vpop.permute.xlu0 %1306
        %v1309 = vsel %vm769, %v1305, 0
        %v1312 = vsel %vm833, %v1307, 0
        %1314 = vmatprep.subr.bf16.mxu0 0
        %1315 = vmatpush1.bf16.msra.mxu0 %v1312
        %1316 = vmatprep.subr.bf16.mxu0 0
        %1317 = vmatpush1.bf16.msra.mxu0 0
        %1318 = vmatprep.subr.bf16.mxu0 0
        %1319 = vmatpush1.bf16.msra.mxu0 0
        %1320 = vmatprep.subr.bf16.mxu0 0
        %1321 = vmatpush1.bf16.msra.mxu0 0
        %1322 = vmatprep.subr.bf16.mxu0 0
        %1323 = vmatpush1.bf16.msra.mxu0 0
        %1324 = vmatprep.subr.bf16.mxu0 0
        %1325 = vmatpush1.bf16.msra.mxu0 0
        %1326 = vmatprep.subr.bf16.mxu0 0
        %1327 = vmatpush1.bf16.msra.mxu0 0
        %1328 = vmatprep.subr.bf16.mxu0 0
        %1329 = vmatpush1.bf16.msra.mxu0 0
        %1330 = vmatprep.subr.bf16.mxu0 0
        %1331 = vmatpush1.bf16.msra.mxu0 0
        %1332 = vmatprep.subr.bf16.mxu0 0
        %1333 = vmatpush1.bf16.msra.mxu0 0
        %1334 = vmatprep.subr.bf16.mxu0 0
        %1335 = vmatpush1.bf16.msra.mxu0 0
        %1336 = vmatprep.subr.bf16.mxu0 0
        %1337 = vmatpush1.bf16.msra.mxu0 0
        %1338 = vmatprep.subr.bf16.mxu0 0
        %1339 = vmatpush1.bf16.msra.mxu0 0
        %1340 = vmatprep.subr.bf16.mxu0 0
        %1341 = vmatpush1.bf16.msra.mxu0 0
        %1342 = vmatprep.subr.bf16.mxu0 0
        %1343 = vmatpush1.bf16.msra.mxu0 0
        %1344 = vmatprep.subr.bf16.mxu0 0
        %1345 = vmatpush1.bf16.msra.mxu0 0
        %1346 = vmatprep.mubr.bf16.mxu0 0
        %1347 = vmatmul.mubr.bf16.gmra.mrb[0].mxu0 %v1309
        %v1348 = vpop.f32.mrb[0].mxu0
        %v1349 = vadd.f32 0.0, %v1348
        %v1350 = vpop.f32.mrb[0].mxu0
        %v1351 = vpop.f32.mrb[0].mxu0
        %v1352 = vpop.f32.mrb[0].mxu0
        %1353 = vdwg.mxu0
        %v1354 = vpack.c.bf16 %v1349, %v1349
        %s1355 = scalar_lea.vmem %s649, 12
        %v1356 = vld [vmem:[%s1355] sm:$0xf]
        %v1358 = vsel %vm769, %v1354, 0
        %v1361 = vsel %vm833, %v1356, 0
        %1363 = vmatprep.subr.bf16.mxu0 0
        %1364 = vmatpush1.bf16.msra.mxu0 %v1361
        %1365 = vmatprep.subr.bf16.mxu0 0
        %1366 = vmatpush1.bf16.msra.mxu0 0
        %1367 = vmatprep.subr.bf16.mxu0 0
        %1368 = vmatpush1.bf16.msra.mxu0 0
        %1369 = vmatprep.subr.bf16.mxu0 0
        %1370 = vmatpush1.bf16.msra.mxu0 0
        %1371 = vmatprep.subr.bf16.mxu0 0
        %1372 = vmatpush1.bf16.msra.mxu0 0
        %1373 = vmatprep.subr.bf16.mxu0 0
        %1374 = vmatpush1.bf16.msra.mxu0 0
        %1375 = vmatprep.subr.bf16.mxu0 0
        %1376 = vmatpush1.bf16.msra.mxu0 0
        %1377 = vmatprep.subr.bf16.mxu0 0
        %1378 = vmatpush1.bf16.msra.mxu0 0
        %1379 = vmatprep.subr.bf16.mxu0 0
        %1380 = vmatpush1.bf16.msra.mxu0 0
        %1381 = vmatprep.subr.bf16.mxu0 0
        %1382 = vmatpush1.bf16.msra.mxu0 0
        %1383 = vmatprep.subr.bf16.mxu0 0
        %1384 = vmatpush1.bf16.msra.mxu0 0
        %1385 = vmatprep.subr.bf16.mxu0 0
        %1386 = vmatpush1.bf16.msra.mxu0 0
        %1387 = vmatprep.subr.bf16.mxu0 0
        %1388 = vmatpush1.bf16.msra.mxu0 0
        %1389 = vmatprep.subr.bf16.mxu0 0
        %1390 = vmatpush1.bf16.msra.mxu0 0
        %1391 = vmatprep.subr.bf16.mxu0 0
        %1392 = vmatpush1.bf16.msra.mxu0 0
        %1393 = vmatprep.subr.bf16.mxu0 0
        %1394 = vmatpush1.bf16.msra.mxu0 0
        %1395 = vmatprep.mubr.bf16.mxu0 0
        %1396 = vmatmul.mubr.bf16.gmra.mrb[0].mxu0 %v1358
        %v1397 = vpop.f32.mrb[0].mxu0
        %v1398 = vadd.f32 0.0, %v1397
        %v1399 = vpop.f32.mrb[0].mxu0
        %v1400 = vpop.f32.mrb[0].mxu0
        %v1401 = vpop.f32.mrb[0].mxu0
        %1402 = vdwg.mxu0
        %v1403 = vadd.f32 %v1243, %v1398
        %v1404 = vld [vmem:[%s652] sm:$0x1]
        %v1406 = vlaneseq
        %v1407 = vshrl.u32 %v1406, 7
        %v1408 = vsub.s32 0, %v1407
        %v1409 = vrot.slane %v1404, %v1408
        %v1411 = vadd.f32 %v1403, %v1409
        %v1412 = vadd.f32 %v1411, %v689
        %v1413 = vld [vmem:[%s655] sm:$0x1]
        %v1414 = vld [vmem:[%s658] sm:$0x1]
        %v1415 = vsel %vm714, %v1412, 0.0
        %1416 = vadd.xlane.f32.xlu0 %v1415
        %v1417 = vpop.xlane.xlu0 %1416
        %v1418 = vrcp.pop 32.0
        %v1419 = vmul.f32 %v1417, %v1418
        %v1420 = vsub.f32 %v1412, %v1419
        %v1421 = vmul.f32 %v1420, %v1420
        %v1422 = vsel %vm714, %v1421, 0.0
        %1423 = vadd.xlane.f32.xlu0 %v1422
        %v1424 = vpop.xlane.xlu0 %1423
        %v1425 = vmul.f32 %v1424, %v1418
        %v1426 = vadd.f32 %v1425, 1e-05
        %v1427 = vrsqrt.pop %v1426
        %v1428 = vmul.f32 %v1420, %v1427
        %v1430 = vlaneseq
        %v1431 = vshrl.u32 %v1430, 7
        %v1432 = vsub.s32 0, %v1431
        %v1433 = vrot.slane %v1413, %v1432
        %v1435 = vmul.f32 %v1428, %v1433
        %v1437 = vlaneseq
        %v1438 = vshrl.u32 %v1437, 7
        %v1439 = vsub.s32 0, %v1438
        %v1440 = vrot.slane %v1414, %v1439
        %v1442 = vadd.f32 %v1435, %v1440
        %v1443 = vpack.c.bf16 %v1442, %v1442
        %v1444 = vld [vmem:[%s669] sm:$0xf]
        %v1445 = vld [vmem:[%s669 + $0x4] sm:$0xf]
        %v1446 = vld [vmem:[%s669 + $0x8] sm:$0xf]
        %v1447 = vld [vmem:[%s669 + $0xc] sm:$0xf]
        %v1448 = vld [vmem:[%s672] sm:$0x1]
        %v1450 = vlaneseq
        %v1451 = vshrl.u32 %v1450, 7
        %v1452 = vsub.s32 0, %v1451
        %v1453 = vrot.slane %v1448, %v1452
        %v1459 = vunpack.c.l.b16 %v1444
        %v1460 = vunpack.c.l.b16 %v1445
        %v1461 = vunpack.c.l.b16 %v1446
        %v1462 = vunpack.c.l.b16 %v1447
        %v1463 = vpack.c.b16 %v1460, %v1459
        %v1464 = vpack.c.b16 %v1462, %v1461
        %v1468 = vsel %vm714, %v1443, 0
        %1470 = vmatprep.subr.bf16.mxu0 0
        %1471 = vmatpush1.bf16.msra.mxu0 %v1463
        %1472 = vmatprep.subr.bf16.mxu0 0
        %1473 = vmatpush1.bf16.msra.mxu0 %v1464
        %1474 = vmatprep.subr.bf16.mxu0 0
        %1475 = vmatpush1.bf16.msra.mxu0 0
        %1476 = vmatprep.subr.bf16.mxu0 0
        %1477 = vmatpush1.bf16.msra.mxu0 0
        %1478 = vmatprep.subr.bf16.mxu0 0
        %1479 = vmatpush1.bf16.msra.mxu0 0
        %1480 = vmatprep.subr.bf16.mxu0 0
        %1481 = vmatpush1.bf16.msra.mxu0 0
        %1482 = vmatprep.subr.bf16.mxu0 0
        %1483 = vmatpush1.bf16.msra.mxu0 0
        %1484 = vmatprep.subr.bf16.mxu0 0
        %1485 = vmatpush1.bf16.msra.mxu0 0
        %1486 = vmatprep.subr.bf16.mxu0 0
        %1487 = vmatpush1.bf16.msra.mxu0 0
        %1488 = vmatprep.subr.bf16.mxu0 0
        %1489 = vmatpush1.bf16.msra.mxu0 0
        %1490 = vmatprep.subr.bf16.mxu0 0
        %1491 = vmatpush1.bf16.msra.mxu0 0
        %1492 = vmatprep.subr.bf16.mxu0 0
        %1493 = vmatpush1.bf16.msra.mxu0 0
        %1494 = vmatprep.subr.bf16.mxu0 0
        %1495 = vmatpush1.bf16.msra.mxu0 0
        %1496 = vmatprep.subr.bf16.mxu0 0
        %1497 = vmatpush1.bf16.msra.mxu0 0
        %1498 = vmatprep.subr.bf16.mxu0 0
        %1499 = vmatpush1.bf16.msra.mxu0 0
        %1500 = vmatprep.subr.bf16.mxu0 0
        %1501 = vmatpush1.bf16.msra.mxu0 0
        %1502 = vmatprep.mubr.bf16.mxu0 0
        %1503 = vmatmul.mubr.bf16.gmra.mrb[0].mxu0 %v1468
        %v1504 = vpop.f32.mrb[0].mxu0
        %v1505 = vadd.f32 %v1453, %v1504
        %v1506 = vpop.f32.mrb[0].mxu0
        %v1507 = vpop.f32.mrb[0].mxu0
        %v1508 = vpop.f32.mrb[0].mxu0
        %1509 = vdwg.mxu0
        %v1510 = vmax.f32 %v1505, 0.0
        %v1511 = vpack.c.bf16 %v1510, %v1510
        %v1512 = vld [vmem:[%s677] sm:$0xf]
        %v1513 = vld [vmem:[%s677 + $0x4] sm:$0xf]
        %v1514 = vld [vmem:[%s677 + $0x8] sm:$0xf]
        %v1515 = vld [vmem:[%s677 + $0xc] sm:$0xf]
        %v1516 = vld [vmem:[%s677 + $0x10] sm:$0xf]
        %v1517 = vld [vmem:[%s677 + $0x14] sm:$0xf]
        %v1518 = vld [vmem:[%s677 + $0x18] sm:$0xf]
        %v1519 = vld [vmem:[%s677 + $0x1c] sm:$0xf]
        %v1520 = vld [vmem:[%s677 + $0x20] sm:$0xf]
        %v1521 = vld [vmem:[%s677 + $0x24] sm:$0xf]
        %v1522 = vld [vmem:[%s677 + $0x28] sm:$0xf]
        %v1523 = vld [vmem:[%s677 + $0x2c] sm:$0xf]
        %v1524 = vld [vmem:[%s677 + $0x30] sm:$0xf]
        %v1525 = vld [vmem:[%s677 + $0x34] sm:$0xf]
        %v1526 = vld [vmem:[%s677 + $0x38] sm:$0xf]
        %v1527 = vld [vmem:[%s677 + $0x3c] sm:$0xf]
        %v1528 = vld [vmem:[%s680] sm:$0x1]
        %v1530 = vlaneseq
        %v1531 = vshrl.u32 %v1530, 7
        %v1532 = vsub.s32 0, %v1531
        %v1533 = vrot.slane %v1528, %v1532
        %v1551 = vunpack.c.l.b16 %v1512
        %v1552 = vunpack.c.l.b16 %v1513
        %v1553 = vunpack.c.l.b16 %v1514
        %v1554 = vunpack.c.l.b16 %v1515
        %v1555 = vunpack.c.l.b16 %v1516
        %v1556 = vunpack.c.l.b16 %v1517
        %v1557 = vunpack.c.l.b16 %v1518
        %v1558 = vunpack.c.l.b16 %v1519
        %v1559 = vunpack.c.l.b16 %v1520
        %v1560 = vunpack.c.l.b16 %v1521
        %v1561 = vunpack.c.l.b16 %v1522
        %v1562 = vunpack.c.l.b16 %v1523
        %v1563 = vunpack.c.l.b16 %v1524
        %v1564 = vunpack.c.l.b16 %v1525
        %v1565 = vunpack.c.l.b16 %v1526
        %v1566 = vunpack.c.l.b16 %v1527
        %v1567 = vpack.c.b16 %v1552, %v1551
        %v1568 = vpack.c.b16 %v1554, %v1553
        %v1569 = vpack.c.b16 %v1556, %v1555
        %v1570 = vpack.c.b16 %v1558, %v1557
        %v1571 = vpack.c.b16 %v1560, %v1559
        %v1572 = vpack.c.b16 %v1562, %v1561
        %v1573 = vpack.c.b16 %v1564, %v1563
        %v1574 = vpack.c.b16 %v1566, %v1565
        %1583 = vmatprep.subr.bf16.mxu0 0
        %1584 = vmatpush1.bf16.msra.mxu0 %v1567
        %1585 = vmatprep.subr.bf16.mxu0 0
        %1586 = vmatpush1.bf16.msra.mxu0 %v1568
        %1587 = vmatprep.subr.bf16.mxu0 0
        %1588 = vmatpush1.bf16.msra.mxu0 %v1569
        %1589 = vmatprep.subr.bf16.mxu0 0
        %1590 = vmatpush1.bf16.msra.mxu0 %v1570
        %1591 = vmatprep.subr.bf16.mxu0 0
        %1592 = vmatpush1.bf16.msra.mxu0 %v1571
        %1593 = vmatprep.subr.bf16.mxu0 0
        %1594 = vmatpush1.bf16.msra.mxu0 %v1572
        %1595 = vmatprep.subr.bf16.mxu0 0
        %1596 = vmatpush1.bf16.msra.mxu0 %v1573
        %1597 = vmatprep.subr.bf16.mxu0 0
        %1598 = vmatpush1.bf16.msra.mxu0 %v1574
        %1599 = vmatprep.subr.bf16.mxu0 0
        %1600 = vmatpush1.bf16.msra.mxu0 0
        %1601 = vmatprep.subr.bf16.mxu0 0
        %1602 = vmatpush1.bf16.msra.mxu0 0
        %1603 = vmatprep.subr.bf16.mxu0 0
        %1604 = vmatpush1.bf16.msra.mxu0 0
        %1605 = vmatprep.subr.bf16.mxu0 0
        %1606 = vmatpush1.bf16.msra.mxu0 0
        %1607 = vmatprep.subr.bf16.mxu0 0
        %1608 = vmatpush1.bf16.msra.mxu0 0
        %1609 = vmatprep.subr.bf16.mxu0 0
        %1610 = vmatpush1.bf16.msra.mxu0 0
        %1611 = vmatprep.subr.bf16.mxu0 0
        %1612 = vmatpush1.bf16.msra.mxu0 0
        %1613 = vmatprep.subr.bf16.mxu0 0
        %1614 = vmatpush1.bf16.msra.mxu0 0
        %1615 = vmatprep.mubr.bf16.mxu0 0
        %1616 = vmatmul.mubr.bf16.gmra.mrb[0].mxu0 %v1511
        %v1617 = vpop.f32.mrb[0].mxu0
        %v1618 = vadd.f32 %v1533, %v1617
        %v1619 = vpop.f32.mrb[0].mxu0
        %v1620 = vpop.f32.mrb[0].mxu0
        %v1621 = vpop.f32.mrb[0].mxu0
        %1622 = vdwg.mxu0
        %v1623 = vadd.f32 %v1618, %v1442
        %v1624 = vld [vmem:[%s661] sm:$0x1]
        %v1625 = vld [vmem:[%s664] sm:$0x1]
        %v1626 = vsel %vm714, %v1623, 0.0
        %1627 = vadd.xlane.f32.xlu0 %v1626
        %v1628 = vpop.xlane.xlu0 %1627
        %v1629 = vmul.f32 %v1628, %v1418
        %v1630 = vsub.f32 %v1623, %v1629
        %v1631 = vmul.f32 %v1630, %v1630
        %v1632 = vsel %vm714, %v1631, 0.0
        %1633 = vadd.xlane.f32.xlu0 %v1632
        %v1634 = vpop.xlane.xlu0 %1633
        %v1635 = vmul.f32 %v1634, %v1418
        %v1636 = vadd.f32 %v1635, 1e-05
        %v1637 = vrsqrt.pop %v1636
        %v1638 = vmul.f32 %v1630, %v1637
        %v1640 = vlaneseq
        %v1641 = vshrl.u32 %v1640, 7
        %v1642 = vsub.s32 0, %v1641
        %v1643 = vrot.slane %v1624, %v1642
        %v1645 = vmul.f32 %v1638, %v1643
        %v1647 = vlaneseq
        %v1648 = vshrl.u32 %v1647, 7
        %v1649 = vsub.s32 0, %v1648
        %v1650 = vrot.slane %v1625, %v1649
        %v1652 = vadd.f32 %v1645, %v1650
        %1653 = vst.msk [vmem:[%s629] sm:$0xff] %vm714, %v1652
        %s1654 = sand.u32 %s412, 1
        %s1655 = scalar_lea.sflag [#allocation3], %s1654
        %s1656 = sand.u32 %s412, 1
        %s1657 = smul.addr %s1656, 8
        %s1658 = scalar_lea.vmem [#allocation2], %s1657
        // Predicated region
        $region81: #{tpu_custom_call.1} parent=75 // pred_check
          %p1659 = pneg %p422
        $region82: #{tpu_custom_call.1} parent=75 // pred_check_branch
          %1661 = sbr.rel (%p1659) target = $region84
        $region83: #{tpu_custom_call.1} parent=75 // pred_region
          %s1663 = ssub.s32 128, 128
          %1664 = vsyncadd %s1655, %s1663
          %s1665 = smul.addr %s32, 128
          %s1666 = scalar_lea.hbm %s14, %s1665
          %s1668 = sshll.u32 %s1658, 4
          %s1669 = int_to_ptr.vmem [resolvable:$true] %s1668
          %1671 = dma.vmem_to_hbm [thread:$0]  %s1669, 128, %s1666, %s1655
        $region84: #{tpu_custom_call.1} parent=75 // pred_fallthru
          _
      $region76: #{tpu_custom_call.1} parent=5 // pred_fallthru
        _
      %p1672 = scmp.le.s32.totalorder 2, %s23
      // Predicated region
      $region85: #{tpu_custom_call.1} parent=5 // pred_check
        %p1673 = pneg %p1672
      $region86: #{tpu_custom_call.1} parent=5 // pred_check_branch
        %1675 = sbr.rel (%p1673) target = $region88
      $region87: #{tpu_custom_call.1} parent=5 // pred_region
        %s1676 = ssub.s32 %s23, 2
        // Predicated region
        $region89: #{tpu_custom_call.1} parent=87 // pred_check
          %p1677 = pneg %p428
        $region90: #{tpu_custom_call.1} parent=87 // pred_check_branch
          %1679 = sbr.rel (%p1677) target = $region92
        $region91: #{tpu_custom_call.1} parent=87 // pred_region
          %s1680 = sand.u32 %s413, 1
          %s1681 = scalar_lea.sflag [#allocation3], %s1680
          %s1682 = sand.u32 %s413, 1
          %s1683 = smul.addr %s1682, 8
          %s1684 = scalar_lea.vmem [#allocation2], %s1683
          %1685 = dma.done %s1681, 128
        $region92: #{tpu_custom_call.1} parent=87 // pred_fallthru
          _
      $region88: #{tpu_custom_call.1} parent=5 // pred_fallthru
        _
    $region6: #{tpu_custom_call.1} parent=1 // loop_footer
      %s27 = sadd.s32 1, %s23
    $region7: #{tpu_custom_call.1} parent=1 // loop_footer_branch
      %22 = sbr.rel target = $region3
    $region8: #{tpu_custom_call.1} parent=1 // loop_exit
      _
    %1686 = vsyncpa [#allocation3], 1
    %s1687 = scalar_lea.sflag [#allocation3], 1
    %1688 = vsyncpa %s1687, 1

</llo_original>
